<compile_context>
chip_gen: v6e
topology: v6e:2x2x1
jax: 0.10.0
libtpu: 0.0.40
codegen_flags: <defaults>
</compile_context>

<pallas_src>
import functools

import jax
import jax.numpy as jnp
from jax import lax
from jax.experimental import pallas as pl
from jax.experimental.pallas import tpu as pltpu


def lstm_lm_kernel(x_ref, h0_ref, c0_ref, wih_ref, whh_ref, b_ref,
                   wfc_ref, bfc_ref,
                   logits_ref, h_out_ref, c_out_ref,
                   gx_s, hall_s, *, seq_len, batch, hidden):
    """Single-invocation LSTM LM forward.

    x_ref      : bf16 (T*B, E)  time-major embedded tokens
    h0/c0      : f32  (B, H)    initial state
    wih_ref    : bf16 (E, 4H)   W_ih^T
    whh_ref    : bf16 (H, 4H)   W_hh^T
    b_ref      : f32  (1, 4H)   b_ih + b_hh
    wfc_ref    : bf16 (H, V)    W_fc^T
    bfc_ref    : f32  (1, V)    b_fc
    logits_ref : f32  (B*T, V)  output logits, already in final (batch*seq) order
    h_out/c_out: f32  (B, H)    final state
    gx_s       : f32  (T*B, 4H) VMEM scratch — precomputed input gates
    hall_s     : f32  (T*B, H)  VMEM scratch — hidden state for every timestep
    """
    # ---- Stage 1: batched input-to-hidden matmul for ALL timesteps at once ----
    gx_s[...] = (
        jnp.dot(x_ref[...], wih_ref[...], preferred_element_type=jnp.float32)
        + b_ref[...])

    # W_hh loaded from VMEM once, reused every step of the recurrence.
    whh = whh_ref[...]                       # bf16 (H, 4H)

    # ---- Stage 2: sequential recurrence (only h @ W_hh remains per step) ----
    def step(t, carry):
        h, c = carry
        lo = pl.multiple_of(t * batch, batch)          # sublane-aligned start
        gates = gx_s[pl.ds(lo, batch), :] + jnp.dot(
            h.astype(jnp.bfloat16), whh, preferred_element_type=jnp.float32)
        # PyTorch LSTMCell gate order: i, f, g, o  (H % 128 == 0 -> lane-aligned)
        i_g = jax.nn.sigmoid(gates[:, 0 * hidden:1 * hidden])
        f_g = jax.nn.sigmoid(gates[:, 1 * hidden:2 * hidden])
        g_g = jnp.tanh(gates[:, 2 * hidden:3 * hidden])
        o_g = jax.nn.sigmoid(gates[:, 3 * hidden:4 * hidden])
        c = f_g * c + i_g * g_g
        h = o_g * jnp.tanh(c)
        hall_s[pl.ds(lo, batch), :] = h
        return (h, c)

    h, c = lax.fori_loop(0, seq_len, step,
                         (h0_ref[...], c0_ref[...]), unroll=True)

    h_out_ref[...] = h.astype(h_out_ref.dtype)
    c_out_ref[...] = c.astype(c_out_ref.dtype)

    # ---- Stage 3: batched output projection, emitted in final (B*T, V) order --
    # Transpose the (cheap, H-wide) hidden slab instead of the (V-wide) logits.
    hall = hall_s[...]                                           # (T*B, H) f32
    hall_bt = jnp.transpose(
        hall.reshape(seq_len, batch, hidden), (1, 0, 2)
    ).reshape(seq_len * batch, hidden)                           # (B*T, H)
    logits_ref[...] = (
        jnp.dot(hall_bt.astype(jnp.bfloat16), wfc_ref[...],
                preferred_element_type=jnp.float32)
        + bfc_ref[...]).astype(logits_ref.dtype)


def lstm_lm_forward(seq_ids, memory, params):
    """seq_ids: int32 (B, T). memory: (h0, c0) each f32 (B, H).
    Returns (logits (B*T, V), (h_T, c_T)) matching the PyTorch Model.forward."""
    h0, c0 = memory
    B, T = seq_ids.shape

    # bf16 weights / activations at the kernel boundary; f32 accumulation inside.
    emb = params["emb"].astype(jnp.bfloat16)
    w_ih = params["w_ih"].astype(jnp.bfloat16)
    w_hh = params["w_hh"].astype(jnp.bfloat16)
    w_fc = params["w_fc"].astype(jnp.bfloat16)
    b, b_fc = params["b"], params["b_fc"]
    H = h0.shape[1]
    V = w_fc.shape[1]

    # Embedding gather emitted directly in time-major order: row t*B + b holds
    # the embedding of seq_ids[b, t].
    flat_ids = jnp.transpose(seq_ids).reshape(-1)      # (T*B,)
    x_flat = jnp.take(emb, flat_ids, axis=0)           # bf16 (T*B, E)

    kernel = functools.partial(lstm_lm_kernel, seq_len=T, batch=B, hidden=H)

    logits, h_T, c_T = pl.pallas_call(
        kernel,
        out_shape=(
            jax.ShapeDtypeStruct((B * T, V), jnp.float32),
            jax.ShapeDtypeStruct((B, H), jnp.float32),
            jax.ShapeDtypeStruct((B, H), jnp.float32),
        ),
        scratch_shapes=[
            pltpu.VMEM((T * B, 4 * H), jnp.float32),   # precomputed input gates
            pltpu.VMEM((T * B, H), jnp.float32),       # h_t for every timestep
        ],
        compiler_params=pltpu.CompilerParams(
            vmem_limit_bytes=32 * 1024 * 1024),
    )(x_flat, h0, c0, w_ih, w_hh, b, w_fc, b_fc)

    return logits, (h_T, c_T)


def reference_forward(seq_ids, memory, params):
    """Pure-JAX reference replicating torch.nn.LSTMCell / Linear semantics.

    Mirrors the kernel's mixed precision: weights / matmul inputs rounded to
    bf16, products accumulated in true f32 (precision=HIGHEST)."""
    bf = lambda a: a.astype(jnp.bfloat16).astype(jnp.float32)
    hp = lax.Precision.HIGHEST
    emb, w_ih, w_hh = bf(params["emb"]), bf(params["w_ih"]), bf(params["w_hh"])
    w_fc = bf(params["w_fc"])
    b, b_fc = params["b"], params["b_fc"]
    h, c = memory
    B, T = seq_ids.shape
    H = h.shape[1]
    outs = []
    for t in range(T):
        x = emb[seq_ids[:, t]]
        gates = (jnp.dot(x, w_ih, precision=hp)
                 + jnp.dot(bf(h), w_hh, precision=hp) + b)
        i_g = jax.nn.sigmoid(gates[:, 0 * H:1 * H])
        f_g = jax.nn.sigmoid(gates[:, 1 * H:2 * H])
        g_g = jnp.tanh(gates[:, 2 * H:3 * H])
        o_g = jax.nn.sigmoid(gates[:, 3 * H:4 * H])
        c = f_g * c + i_g * g_g
        h = o_g * jnp.tanh(c)
        outs.append(jnp.dot(bf(h), w_fc, precision=hp) + b_fc)
    logits_tbv = jnp.stack(outs, axis=0)               # (T, B, V)
    V = logits_tbv.shape[-1]
    # rearrange 'seq_len batch v -> (batch seq_len) v'
    return jnp.transpose(logits_tbv, (1, 0, 2)).reshape(B * T, V), (h, c)


if __name__ == "__main__":
    # Small shapes consistent with the module (Config: lstm_size=embed=128).
    B, T, E, H, V = 8, 8, 128, 128, 256

    key = jax.random.PRNGKey(0)
    keys = jax.random.split(key, 10)
    scale = 1.0 / jnp.sqrt(jnp.float32(H))

    params = {
        # nn.Embedding: N(0,1) init
        "emb": jax.random.normal(keys[0], (V, E), jnp.float32),
        # nn.LSTMCell weights stored pre-transposed: (E, 4H) / (H, 4H)
        "w_ih": jax.random.uniform(keys[1], (E, 4 * H), jnp.float32, -scale, scale),
        "w_hh": jax.random.uniform(keys[2], (H, 4 * H), jnp.float32, -scale, scale),
        # combined b_ih + b_hh, kept 2D for TPU layout
        "b": jax.random.uniform(keys[3], (1, 4 * H), jnp.float32, -scale, scale),
        # nn.Linear(H, V) pre-transposed
        "w_fc": jax.random.uniform(keys[4], (H, V), jnp.float32, -scale, scale),
        "b_fc": jax.random.uniform(keys[5], (1, V), jnp.float32, -scale, scale),
    }

    seq_ids = jax.random.randint(keys[6], (B, T), 0, V, dtype=jnp.int32)
    h0 = jax.random.uniform(keys[7], (B, H), jnp.float32)   # matches init_state (rand)
    c0 = jax.random.uniform(keys[8], (B, H), jnp.float32)

    # Dropout has p=0 in the config -> identity; omitted.
    logits, (h_T, c_T) = lstm_lm_forward(seq_ids, (h0, c0), params)
    jax.block_until_ready((logits, h_T, c_T))

    ref_logits, (ref_h, ref_c) = reference_forward(seq_ids, (h0, c0), params)
    assert logits.shape == (B * T, V)
    assert jnp.allclose(logits, ref_logits, atol=1e-2, rtol=1e-2)
    assert jnp.allclose(h_T, ref_h, atol=1e-2, rtol=1e-2)
    assert jnp.allclose(c_T, ref_c, atol=1e-2, rtol=1e-2)

    print("KERNEL_OK")
</pallas_src>

<mosaic_0001>
module attributes {stable_mosaic.version = 11 : i64} {
  func.func @lstm_lm_kernel(%arg0: memref<64x128xbf16, #tpu.memory_space<vmem>>, %arg1: memref<8x128xf32, #tpu.memory_space<vmem>>, %arg2: memref<8x128xf32, #tpu.memory_space<vmem>>, %arg3: memref<128x512xbf16, #tpu.memory_space<vmem>>, %arg4: memref<128x512xbf16, #tpu.memory_space<vmem>>, %arg5: memref<1x512xf32, #tpu.memory_space<vmem>>, %arg6: memref<128x256xbf16, #tpu.memory_space<vmem>>, %arg7: memref<1x256xf32, #tpu.memory_space<vmem>>, %arg8: memref<64x256xf32, #tpu.memory_space<vmem>>, %arg9: memref<8x128xf32, #tpu.memory_space<vmem>>, %arg10: memref<8x128xf32, #tpu.memory_space<vmem>>, %arg11: memref<64x512xf32, #tpu.memory_space<vmem>>, %arg12: memref<64x128xf32, #tpu.memory_space<vmem>>) attributes {dimension_semantics = [], scalar_prefetch = 0 : i64, scratch_operands = 2 : i64, tpu.core_type = #tpu.core_type<tc>} {
    %c0 = arith.constant 0 : index
    %c0_0 = arith.constant 0 : index
    %0 = vector.load %arg0[%c0, %c0_0] : memref<64x128xbf16, #tpu.memory_space<vmem>>, vector<64x128xbf16>
    %c0_1 = arith.constant 0 : index
    %c0_2 = arith.constant 0 : index
    %1 = vector.load %arg3[%c0_1, %c0_2] : memref<128x512xbf16, #tpu.memory_space<vmem>>, vector<128x512xbf16>
    %cst = arith.constant dense<0.000000e+00> : vector<64x512xf32>
    %2 = tpu.matmul %0, %1, %cst {dimension_numbers = #tpu.dot_dimension_numbers<[1], [0], [0], [1], [0, 0, 1, 1], [], []>} : vector<64x128xbf16>, vector<128x512xbf16>, vector<64x512xf32> -> vector<64x512xf32>
    %c0_3 = arith.constant 0 : index
    %c0_4 = arith.constant 0 : index
    %3 = vector.load %arg5[%c0_3, %c0_4] : memref<1x512xf32, #tpu.memory_space<vmem>>, vector<1x512xf32>
    %4 = vector.broadcast %3 : vector<1x512xf32> to vector<64x512xf32>
    %5 = arith.addf %2, %4 : vector<64x512xf32>
    %c0_5 = arith.constant 0 : index
    %c0_6 = arith.constant 0 : index
    %6 = vector.load %arg11[%c0_5, %c0_6] : memref<64x512xf32, #tpu.memory_space<vmem>>, vector<64x512xf32>
    tpu.vector_store %arg11[%c0_5, %c0_6], %5 {strides = array<i32>} : memref<64x512xf32, #tpu.memory_space<vmem>>, vector<64x512xf32>,
    %c0_7 = arith.constant 0 : index
    %c0_8 = arith.constant 0 : index
    %7 = vector.load %arg4[%c0_7, %c0_8] : memref<128x512xbf16, #tpu.memory_space<vmem>>, vector<128x512xbf16>
    %c0_9 = arith.constant 0 : index
    %c0_10 = arith.constant 0 : index
    %8 = vector.load %arg1[%c0_9, %c0_10] : memref<8x128xf32, #tpu.memory_space<vmem>>, vector<8x128xf32>
    %c0_11 = arith.constant 0 : index
    %c0_12 = arith.constant 0 : index
    %9 = vector.load %arg2[%c0_11, %c0_12] : memref<8x128xf32, #tpu.memory_space<vmem>>, vector<8x128xf32>
    %c0_i32 = arith.constant 0 : i32
    %c8_i32 = arith.constant 8 : i32
    %10 = arith.muli %c0_i32, %c8_i32 : i32
    %11 = tpu.assume_multiple %10, 8 : i32
    %12 = arith.index_cast %11 : i32 to index
    %c0_13 = arith.constant 0 : index
    %13 = vector.load %arg11[%12, %c0_13] : memref<64x512xf32, #tpu.memory_space<vmem>>, vector<8x512xf32>
    %14 = arith.truncf %8 : vector<8x128xf32> to vector<8x128xbf16>
    %cst_14 = arith.constant dense<0.000000e+00> : vector<8x512xf32>
    %15 = tpu.matmul %14, %7, %cst_14 {dimension_numbers = #tpu.dot_dimension_numbers<[1], [0], [0], [1], [0, 0, 1, 1], [], []>} : vector<8x128xbf16>, vector<128x512xbf16>, vector<8x512xf32> -> vector<8x512xf32>
    %16 = arith.addf %13, %15 : vector<8x512xf32>
    %17 = vector.extract_strided_slice %16 {offsets = [0, 0], sizes = [8, 128], strides = [1, 1]} : vector<8x512xf32> to vector<8x128xf32>
    %18 = arith.negf %17 : vector<8x128xf32>
    %19 = math.exp %18 : vector<8x128xf32>
    %cst_15 = arith.constant 1.000000e+00 : f32
    %20 = vector.broadcast %cst_15 : f32 to vector<8x128xf32>
    %21 = arith.addf %20, %19 : vector<8x128xf32>
    %22 = arith.divf %20, %21 : vector<8x128xf32>
    %23 = vector.extract_strided_slice %16 {offsets = [0, 128], sizes = [8, 128], strides = [1, 1]} : vector<8x512xf32> to vector<8x128xf32>
    %24 = arith.negf %23 : vector<8x128xf32>
    %25 = math.exp %24 : vector<8x128xf32>
    %cst_16 = arith.constant 1.000000e+00 : f32
    %26 = vector.broadcast %cst_16 : f32 to vector<8x128xf32>
    %27 = arith.addf %26, %25 : vector<8x128xf32>
    %28 = arith.divf %26, %27 : vector<8x128xf32>
    %29 = vector.extract_strided_slice %16 {offsets = [0, 256], sizes = [8, 128], strides = [1, 1]} : vector<8x512xf32> to vector<8x128xf32>
    %30 = math.tanh %29 : vector<8x128xf32>
    %31 = vector.extract_strided_slice %16 {offsets = [0, 384], sizes = [8, 128], strides = [1, 1]} : vector<8x512xf32> to vector<8x128xf32>
    %32 = arith.negf %31 : vector<8x128xf32>
    %33 = math.exp %32 : vector<8x128xf32>
    %cst_17 = arith.constant 1.000000e+00 : f32
    %34 = vector.broadcast %cst_17 : f32 to vector<8x128xf32>
    %35 = arith.addf %34, %33 : vector<8x128xf32>
    %36 = arith.divf %34, %35 : vector<8x128xf32>
    %37 = arith.mulf %28, %9 : vector<8x128xf32>
    %38 = arith.mulf %22, %30 : vector<8x128xf32>
    %39 = arith.addf %37, %38 : vector<8x128xf32>
    %40 = math.tanh %39 : vector<8x128xf32>
    %41 = arith.mulf %36, %40 : vector<8x128xf32>
    %42 = arith.index_cast %11 : i32 to index
    %c0_18 = arith.constant 0 : index
    %43 = vector.load %arg12[%42, %c0_18] : memref<64x128xf32, #tpu.memory_space<vmem>>, vector<8x128xf32>
    tpu.vector_store %arg12[%42, %c0_18], %41 {strides = array<i32>} : memref<64x128xf32, #tpu.memory_space<vmem>>, vector<8x128xf32>,
    %c1_i32 = arith.constant 1 : i32
    %c8_i32_19 = arith.constant 8 : i32
    %44 = arith.muli %c1_i32, %c8_i32_19 : i32
    %45 = tpu.assume_multiple %44, 8 : i32
    %46 = arith.index_cast %45 : i32 to index
    %c0_20 = arith.constant 0 : index
    %47 = vector.load %arg11[%46, %c0_20] : memref<64x512xf32, #tpu.memory_space<vmem>>, vector<8x512xf32>
    %48 = arith.truncf %41 : vector<8x128xf32> to vector<8x128xbf16>
    %cst_21 = arith.constant dense<0.000000e+00> : vector<8x512xf32>
    %49 = tpu.matmul %48, %7, %cst_21 {dimension_numbers = #tpu.dot_dimension_numbers<[1], [0], [0], [1], [0, 0, 1, 1], [], []>} : vector<8x128xbf16>, vector<128x512xbf16>, vector<8x512xf32> -> vector<8x512xf32>
    %50 = arith.addf %47, %49 : vector<8x512xf32>
    %51 = vector.extract_strided_slice %50 {offsets = [0, 0], sizes = [8, 128], strides = [1, 1]} : vector<8x512xf32> to vector<8x128xf32>
    %52 = arith.negf %51 : vector<8x128xf32>
    %53 = math.exp %52 : vector<8x128xf32>
    %cst_22 = arith.constant 1.000000e+00 : f32
    %54 = vector.broadcast %cst_22 : f32 to vector<8x128xf32>
    %55 = arith.addf %54, %53 : vector<8x128xf32>
    %56 = arith.divf %54, %55 : vector<8x128xf32>
    %57 = vector.extract_strided_slice %50 {offsets = [0, 128], sizes = [8, 128], strides = [1, 1]} : vector<8x512xf32> to vector<8x128xf32>
    %58 = arith.negf %57 : vector<8x128xf32>
    %59 = math.exp %58 : vector<8x128xf32>
    %cst_23 = arith.constant 1.000000e+00 : f32
    %60 = vector.broadcast %cst_23 : f32 to vector<8x128xf32>
    %61 = arith.addf %60, %59 : vector<8x128xf32>
    %62 = arith.divf %60, %61 : vector<8x128xf32>
    %63 = vector.extract_strided_slice %50 {offsets = [0, 256], sizes = [8, 128], strides = [1, 1]} : vector<8x512xf32> to vector<8x128xf32>
    %64 = math.tanh %63 : vector<8x128xf32>
    %65 = vector.extract_strided_slice %50 {offsets = [0, 384], sizes = [8, 128], strides = [1, 1]} : vector<8x512xf32> to vector<8x128xf32>
    %66 = arith.negf %65 : vector<8x128xf32>
    %67 = math.exp %66 : vector<8x128xf32>
    %cst_24 = arith.constant 1.000000e+00 : f32
    %68 = vector.broadcast %cst_24 : f32 to vector<8x128xf32>
    %69 = arith.addf %68, %67 : vector<8x128xf32>
    %70 = arith.divf %68, %69 : vector<8x128xf32>
    %71 = arith.mulf %62, %39 : vector<8x128xf32>
    %72 = arith.mulf %56, %64 : vector<8x128xf32>
    %73 = arith.addf %71, %72 : vector<8x128xf32>
    %74 = math.tanh %73 : vector<8x128xf32>
    %75 = arith.mulf %70, %74 : vector<8x128xf32>
    %76 = arith.index_cast %45 : i32 to index
    %c0_25 = arith.constant 0 : index
    %77 = vector.load %arg12[%76, %c0_25] : memref<64x128xf32, #tpu.memory_space<vmem>>, vector<8x128xf32>
    tpu.vector_store %arg12[%76, %c0_25], %75 {strides = array<i32>} : memref<64x128xf32, #tpu.memory_space<vmem>>, vector<8x128xf32>,
    %c2_i32 = arith.constant 2 : i32
    %c8_i32_26 = arith.constant 8 : i32
    %78 = arith.muli %c2_i32, %c8_i32_26 : i32
    %79 = tpu.assume_multiple %78, 8 : i32
    %80 = arith.index_cast %79 : i32 to index
    %c0_27 = arith.constant 0 : index
    %81 = vector.load %arg11[%80, %c0_27] : memref<64x512xf32, #tpu.memory_space<vmem>>, vector<8x512xf32>
    %82 = arith.truncf %75 : vector<8x128xf32> to vector<8x128xbf16>
    %cst_28 = arith.constant dense<0.000000e+00> : vector<8x512xf32>
    %83 = tpu.matmul %82, %7, %cst_28 {dimension_numbers = #tpu.dot_dimension_numbers<[1], [0], [0], [1], [0, 0, 1, 1], [], []>} : vector<8x128xbf16>, vector<128x512xbf16>, vector<8x512xf32> -> vector<8x512xf32>
    %84 = arith.addf %81, %83 : vector<8x512xf32>
    %85 = vector.extract_strided_slice %84 {offsets = [0, 0], sizes = [8, 128], strides = [1, 1]} : vector<8x512xf32> to vector<8x128xf32>
    %86 = arith.negf %85 : vector<8x128xf32>
    %87 = math.exp %86 : vector<8x128xf32>
    %cst_29 = arith.constant 1.000000e+00 : f32
    %88 = vector.broadcast %cst_29 : f32 to vector<8x128xf32>
    %89 = arith.addf %88, %87 : vector<8x128xf32>
    %90 = arith.divf %88, %89 : vector<8x128xf32>
    %91 = vector.extract_strided_slice %84 {offsets = [0, 128], sizes = [8, 128], strides = [1, 1]} : vector<8x512xf32> to vector<8x128xf32>
    %92 = arith.negf %91 : vector<8x128xf32>
    %93 = math.exp %92 : vector<8x128xf32>
    %cst_30 = arith.constant 1.000000e+00 : f32
    %94 = vector.broadcast %cst_30 : f32 to vector<8x128xf32>
    %95 = arith.addf %94, %93 : vector<8x128xf32>
    %96 = arith.divf %94, %95 : vector<8x128xf32>
    %97 = vector.extract_strided_slice %84 {offsets = [0, 256], sizes = [8, 128], strides = [1, 1]} : vector<8x512xf32> to vector<8x128xf32>
    %98 = math.tanh %97 : vector<8x128xf32>
    %99 = vector.extract_strided_slice %84 {offsets = [0, 384], sizes = [8, 128], strides = [1, 1]} : vector<8x512xf32> to vector<8x128xf32>
    %100 = arith.negf %99 : vector<8x128xf32>
    %101 = math.exp %100 : vector<8x128xf32>
    %cst_31 = arith.constant 1.000000e+00 : f32
    %102 = vector.broadcast %cst_31 : f32 to vector<8x128xf32>
    %103 = arith.addf %102, %101 : vector<8x128xf32>
    %104 = arith.divf %102, %103 : vector<8x128xf32>
    %105 = arith.mulf %96, %73 : vector<8x128xf32>
    %106 = arith.mulf %90, %98 : vector<8x128xf32>
    %107 = arith.addf %105, %106 : vector<8x128xf32>
    %108 = math.tanh %107 : vector<8x128xf32>
    %109 = arith.mulf %104, %108 : vector<8x128xf32>
    %110 = arith.index_cast %79 : i32 to index
    %c0_32 = arith.constant 0 : index
    %111 = vector.load %arg12[%110, %c0_32] : memref<64x128xf32, #tpu.memory_space<vmem>>, vector<8x128xf32>
    tpu.vector_store %arg12[%110, %c0_32], %109 {strides = array<i32>} : memref<64x128xf32, #tpu.memory_space<vmem>>, vector<8x128xf32>,
    %c3_i32 = arith.constant 3 : i32
    %c8_i32_33 = arith.constant 8 : i32
    %112 = arith.muli %c3_i32, %c8_i32_33 : i32
    %113 = tpu.assume_multiple %112, 8 : i32
    %114 = arith.index_cast %113 : i32 to index
    %c0_34 = arith.constant 0 : index
    %115 = vector.load %arg11[%114, %c0_34] : memref<64x512xf32, #tpu.memory_space<vmem>>, vector<8x512xf32>
    %116 = arith.truncf %109 : vector<8x128xf32> to vector<8x128xbf16>
    %cst_35 = arith.constant dense<0.000000e+00> : vector<8x512xf32>
    %117 = tpu.matmul %116, %7, %cst_35 {dimension_numbers = #tpu.dot_dimension_numbers<[1], [0], [0], [1], [0, 0, 1, 1], [], []>} : vector<8x128xbf16>, vector<128x512xbf16>, vector<8x512xf32> -> vector<8x512xf32>
    %118 = arith.addf %115, %117 : vector<8x512xf32>
    %119 = vector.extract_strided_slice %118 {offsets = [0, 0], sizes = [8, 128], strides = [1, 1]} : vector<8x512xf32> to vector<8x128xf32>
    %120 = arith.negf %119 : vector<8x128xf32>
    %121 = math.exp %120 : vector<8x128xf32>
    %cst_36 = arith.constant 1.000000e+00 : f32
    %122 = vector.broadcast %cst_36 : f32 to vector<8x128xf32>
    %123 = arith.addf %122, %121 : vector<8x128xf32>
    %124 = arith.divf %122, %123 : vector<8x128xf32>
    %125 = vector.extract_strided_slice %118 {offsets = [0, 128], sizes = [8, 128], strides = [1, 1]} : vector<8x512xf32> to vector<8x128xf32>
    %126 = arith.negf %125 : vector<8x128xf32>
    %127 = math.exp %126 : vector<8x128xf32>
    %cst_37 = arith.constant 1.000000e+00 : f32
    %128 = vector.broadcast %cst_37 : f32 to vector<8x128xf32>
    %129 = arith.addf %128, %127 : vector<8x128xf32>
    %130 = arith.divf %128, %129 : vector<8x128xf32>
    %131 = vector.extract_strided_slice %118 {offsets = [0, 256], sizes = [8, 128], strides = [1, 1]} : vector<8x512xf32> to vector<8x128xf32>
    %132 = math.tanh %131 : vector<8x128xf32>
    %133 = vector.extract_strided_slice %118 {offsets = [0, 384], sizes = [8, 128], strides = [1, 1]} : vector<8x512xf32> to vector<8x128xf32>
    %134 = arith.negf %133 : vector<8x128xf32>
    %135 = math.exp %134 : vector<8x128xf32>
    %cst_38 = arith.constant 1.000000e+00 : f32
    %136 = vector.broadcast %cst_38 : f32 to vector<8x128xf32>
    %137 = arith.addf %136, %135 : vector<8x128xf32>
    %138 = arith.divf %136, %137 : vector<8x128xf32>
    %139 = arith.mulf %130, %107 : vector<8x128xf32>
    %140 = arith.mulf %124, %132 : vector<8x128xf32>
    %141 = arith.addf %139, %140 : vector<8x128xf32>
    %142 = math.tanh %141 : vector<8x128xf32>
    %143 = arith.mulf %138, %142 : vector<8x128xf32>
    %144 = arith.index_cast %113 : i32 to index
    %c0_39 = arith.constant 0 : index
    %145 = vector.load %arg12[%144, %c0_39] : memref<64x128xf32, #tpu.memory_space<vmem>>, vector<8x128xf32>
    tpu.vector_store %arg12[%144, %c0_39], %143 {strides = array<i32>} : memref<64x128xf32, #tpu.memory_space<vmem>>, vector<8x128xf32>,
    %c4_i32 = arith.constant 4 : i32
    %c8_i32_40 = arith.constant 8 : i32
    %146 = arith.muli %c4_i32, %c8_i32_40 : i32
    %147 = tpu.assume_multiple %146, 8 : i32
    %148 = arith.index_cast %147 : i32 to index
    %c0_41 = arith.constant 0 : index
    %149 = vector.load %arg11[%148, %c0_41] : memref<64x512xf32, #tpu.memory_space<vmem>>, vector<8x512xf32>
    %150 = arith.truncf %143 : vector<8x128xf32> to vector<8x128xbf16>
    %cst_42 = arith.constant dense<0.000000e+00> : vector<8x512xf32>
    %151 = tpu.matmul %150, %7, %cst_42 {dimension_numbers = #tpu.dot_dimension_numbers<[1], [0], [0], [1], [0, 0, 1, 1], [], []>} : vector<8x128xbf16>, vector<128x512xbf16>, vector<8x512xf32> -> vector<8x512xf32>
    %152 = arith.addf %149, %151 : vector<8x512xf32>
    %153 = vector.extract_strided_slice %152 {offsets = [0, 0], sizes = [8, 128], strides = [1, 1]} : vector<8x512xf32> to vector<8x128xf32>
    %154 = arith.negf %153 : vector<8x128xf32>
    %155 = math.exp %154 : vector<8x128xf32>
    %cst_43 = arith.constant 1.000000e+00 : f32
    %156 = vector.broadcast %cst_43 : f32 to vector<8x128xf32>
    %157 = arith.addf %156, %155 : vector<8x128xf32>
    %158 = arith.divf %156, %157 : vector<8x128xf32>
    %159 = vector.extract_strided_slice %152 {offsets = [0, 128], sizes = [8, 128], strides = [1, 1]} : vector<8x512xf32> to vector<8x128xf32>
    %160 = arith.negf %159 : vector<8x128xf32>
    %161 = math.exp %160 : vector<8x128xf32>
    %cst_44 = arith.constant 1.000000e+00 : f32
    %162 = vector.broadcast %cst_44 : f32 to vector<8x128xf32>
    %163 = arith.addf %162, %161 : vector<8x128xf32>
    %164 = arith.divf %162, %163 : vector<8x128xf32>
    %165 = vector.extract_strided_slice %152 {offsets = [0, 256], sizes = [8, 128], strides = [1, 1]} : vector<8x512xf32> to vector<8x128xf32>
    %166 = math.tanh %165 : vector<8x128xf32>
    %167 = vector.extract_strided_slice %152 {offsets = [0, 384], sizes = [8, 128], strides = [1, 1]} : vector<8x512xf32> to vector<8x128xf32>
    %168 = arith.negf %167 : vector<8x128xf32>
    %169 = math.exp %168 : vector<8x128xf32>
    %cst_45 = arith.constant 1.000000e+00 : f32
    %170 = vector.broadcast %cst_45 : f32 to vector<8x128xf32>
    %171 = arith.addf %170, %169 : vector<8x128xf32>
    %172 = arith.divf %170, %171 : vector<8x128xf32>
    %173 = arith.mulf %164, %141 : vector<8x128xf32>
    %174 = arith.mulf %158, %166 : vector<8x128xf32>
    %175 = arith.addf %173, %174 : vector<8x128xf32>
    %176 = math.tanh %175 : vector<8x128xf32>
    %177 = arith.mulf %172, %176 : vector<8x128xf32>
    %178 = arith.index_cast %147 : i32 to index
    %c0_46 = arith.constant 0 : index
    %179 = vector.load %arg12[%178, %c0_46] : memref<64x128xf32, #tpu.memory_space<vmem>>, vector<8x128xf32>
    tpu.vector_store %arg12[%178, %c0_46], %177 {strides = array<i32>} : memref<64x128xf32, #tpu.memory_space<vmem>>, vector<8x128xf32>,
    %c5_i32 = arith.constant 5 : i32
    %c8_i32_47 = arith.constant 8 : i32
    %180 = arith.muli %c5_i32, %c8_i32_47 : i32
    %181 = tpu.assume_multiple %180, 8 : i32
    %182 = arith.index_cast %181 : i32 to index
    %c0_48 = arith.constant 0 : index
    %183 = vector.load %arg11[%182, %c0_48] : memref<64x512xf32, #tpu.memory_space<vmem>>, vector<8x512xf32>
    %184 = arith.truncf %177 : vector<8x128xf32> to vector<8x128xbf16>
    %cst_49 = arith.constant dense<0.000000e+00> : vector<8x512xf32>
    %185 = tpu.matmul %184, %7, %cst_49 {dimension_numbers = #tpu.dot_dimension_numbers<[1], [0], [0], [1], [0, 0, 1, 1], [], []>} : vector<8x128xbf16>, vector<128x512xbf16>, vector<8x512xf32> -> vector<8x512xf32>
    %186 = arith.addf %183, %185 : vector<8x512xf32>
    %187 = vector.extract_strided_slice %186 {offsets = [0, 0], sizes = [8, 128], strides = [1, 1]} : vector<8x512xf32> to vector<8x128xf32>
    %188 = arith.negf %187 : vector<8x128xf32>
    %189 = math.exp %188 : vector<8x128xf32>
    %cst_50 = arith.constant 1.000000e+00 : f32
    %190 = vector.broadcast %cst_50 : f32 to vector<8x128xf32>
    %191 = arith.addf %190, %189 : vector<8x128xf32>
    %192 = arith.divf %190, %191 : vector<8x128xf32>
    %193 = vector.extract_strided_slice %186 {offsets = [0, 128], sizes = [8, 128], strides = [1, 1]} : vector<8x512xf32> to vector<8x128xf32>
    %194 = arith.negf %193 : vector<8x128xf32>
    %195 = math.exp %194 : vector<8x128xf32>
    %cst_51 = arith.constant 1.000000e+00 : f32
    %196 = vector.broadcast %cst_51 : f32 to vector<8x128xf32>
    %197 = arith.addf %196, %195 : vector<8x128xf32>
    %198 = arith.divf %196, %197 : vector<8x128xf32>
    %199 = vector.extract_strided_slice %186 {offsets = [0, 256], sizes = [8, 128], strides = [1, 1]} : vector<8x512xf32> to vector<8x128xf32>
    %200 = math.tanh %199 : vector<8x128xf32>
    %201 = vector.extract_strided_slice %186 {offsets = [0, 384], sizes = [8, 128], strides = [1, 1]} : vector<8x512xf32> to vector<8x128xf32>
    %202 = arith.negf %201 : vector<8x128xf32>
    %203 = math.exp %202 : vector<8x128xf32>
    %cst_52 = arith.constant 1.000000e+00 : f32
    %204 = vector.broadcast %cst_52 : f32 to vector<8x128xf32>
    %205 = arith.addf %204, %203 : vector<8x128xf32>
    %206 = arith.divf %204, %205 : vector<8x128xf32>
    %207 = arith.mulf %198, %175 : vector<8x128xf32>
    %208 = arith.mulf %192, %200 : vector<8x128xf32>
    %209 = arith.addf %207, %208 : vector<8x128xf32>
    %210 = math.tanh %209 : vector<8x128xf32>
    %211 = arith.mulf %206, %210 : vector<8x128xf32>
    %212 = arith.index_cast %181 : i32 to index
    %c0_53 = arith.constant 0 : index
    %213 = vector.load %arg12[%212, %c0_53] : memref<64x128xf32, #tpu.memory_space<vmem>>, vector<8x128xf32>
    tpu.vector_store %arg12[%212, %c0_53], %211 {strides = array<i32>} : memref<64x128xf32, #tpu.memory_space<vmem>>, vector<8x128xf32>,
    %c6_i32 = arith.constant 6 : i32
    %c8_i32_54 = arith.constant 8 : i32
    %214 = arith.muli %c6_i32, %c8_i32_54 : i32
    %215 = tpu.assume_multiple %214, 8 : i32
    %216 = arith.index_cast %215 : i32 to index
    %c0_55 = arith.constant 0 : index
    %217 = vector.load %arg11[%216, %c0_55] : memref<64x512xf32, #tpu.memory_space<vmem>>, vector<8x512xf32>
    %218 = arith.truncf %211 : vector<8x128xf32> to vector<8x128xbf16>
    %cst_56 = arith.constant dense<0.000000e+00> : vector<8x512xf32>
    %219 = tpu.matmul %218, %7, %cst_56 {dimension_numbers = #tpu.dot_dimension_numbers<[1], [0], [0], [1], [0, 0, 1, 1], [], []>} : vector<8x128xbf16>, vector<128x512xbf16>, vector<8x512xf32> -> vector<8x512xf32>
    %220 = arith.addf %217, %219 : vector<8x512xf32>
    %221 = vector.extract_strided_slice %220 {offsets = [0, 0], sizes = [8, 128], strides = [1, 1]} : vector<8x512xf32> to vector<8x128xf32>
    %222 = arith.negf %221 : vector<8x128xf32>
    %223 = math.exp %222 : vector<8x128xf32>
    %cst_57 = arith.constant 1.000000e+00 : f32
    %224 = vector.broadcast %cst_57 : f32 to vector<8x128xf32>
    %225 = arith.addf %224, %223 : vector<8x128xf32>
    %226 = arith.divf %224, %225 : vector<8x128xf32>
    %227 = vector.extract_strided_slice %220 {offsets = [0, 128], sizes = [8, 128], strides = [1, 1]} : vector<8x512xf32> to vector<8x128xf32>
    %228 = arith.negf %227 : vector<8x128xf32>
    %229 = math.exp %228 : vector<8x128xf32>
    %cst_58 = arith.constant 1.000000e+00 : f32
    %230 = vector.broadcast %cst_58 : f32 to vector<8x128xf32>
    %231 = arith.addf %230, %229 : vector<8x128xf32>
    %232 = arith.divf %230, %231 : vector<8x128xf32>
    %233 = vector.extract_strided_slice %220 {offsets = [0, 256], sizes = [8, 128], strides = [1, 1]} : vector<8x512xf32> to vector<8x128xf32>
    %234 = math.tanh %233 : vector<8x128xf32>
    %235 = vector.extract_strided_slice %220 {offsets = [0, 384], sizes = [8, 128], strides = [1, 1]} : vector<8x512xf32> to vector<8x128xf32>
    %236 = arith.negf %235 : vector<8x128xf32>
    %237 = math.exp %236 : vector<8x128xf32>
    %cst_59 = arith.constant 1.000000e+00 : f32
    %238 = vector.broadcast %cst_59 : f32 to vector<8x128xf32>
    %239 = arith.addf %238, %237 : vector<8x128xf32>
    %240 = arith.divf %238, %239 : vector<8x128xf32>
    %241 = arith.mulf %232, %209 : vector<8x128xf32>
    %242 = arith.mulf %226, %234 : vector<8x128xf32>
    %243 = arith.addf %241, %242 : vector<8x128xf32>
    %244 = math.tanh %243 : vector<8x128xf32>
    %245 = arith.mulf %240, %244 : vector<8x128xf32>
    %246 = arith.index_cast %215 : i32 to index
    %c0_60 = arith.constant 0 : index
    %247 = vector.load %arg12[%246, %c0_60] : memref<64x128xf32, #tpu.memory_space<vmem>>, vector<8x128xf32>
    tpu.vector_store %arg12[%246, %c0_60], %245 {strides = array<i32>} : memref<64x128xf32, #tpu.memory_space<vmem>>, vector<8x128xf32>,
    %c7_i32 = arith.constant 7 : i32
    %c8_i32_61 = arith.constant 8 : i32
    %248 = arith.muli %c7_i32, %c8_i32_61 : i32
    %249 = tpu.assume_multiple %248, 8 : i32
    %250 = arith.index_cast %249 : i32 to index
    %c0_62 = arith.constant 0 : index
    %251 = vector.load %arg11[%250, %c0_62] : memref<64x512xf32, #tpu.memory_space<vmem>>, vector<8x512xf32>
    %252 = arith.truncf %245 : vector<8x128xf32> to vector<8x128xbf16>
    %cst_63 = arith.constant dense<0.000000e+00> : vector<8x512xf32>
    %253 = tpu.matmul %252, %7, %cst_63 {dimension_numbers = #tpu.dot_dimension_numbers<[1], [0], [0], [1], [0, 0, 1, 1], [], []>} : vector<8x128xbf16>, vector<128x512xbf16>, vector<8x512xf32> -> vector<8x512xf32>
    %254 = arith.addf %251, %253 : vector<8x512xf32>
    %255 = vector.extract_strided_slice %254 {offsets = [0, 0], sizes = [8, 128], strides = [1, 1]} : vector<8x512xf32> to vector<8x128xf32>
    %256 = arith.negf %255 : vector<8x128xf32>
    %257 = math.exp %256 : vector<8x128xf32>
    %cst_64 = arith.constant 1.000000e+00 : f32
    %258 = vector.broadcast %cst_64 : f32 to vector<8x128xf32>
    %259 = arith.addf %258, %257 : vector<8x128xf32>
    %260 = arith.divf %258, %259 : vector<8x128xf32>
    %261 = vector.extract_strided_slice %254 {offsets = [0, 128], sizes = [8, 128], strides = [1, 1]} : vector<8x512xf32> to vector<8x128xf32>
    %262 = arith.negf %261 : vector<8x128xf32>
    %263 = math.exp %262 : vector<8x128xf32>
    %cst_65 = arith.constant 1.000000e+00 : f32
    %264 = vector.broadcast %cst_65 : f32 to vector<8x128xf32>
    %265 = arith.addf %264, %263 : vector<8x128xf32>
    %266 = arith.divf %264, %265 : vector<8x128xf32>
    %267 = vector.extract_strided_slice %254 {offsets = [0, 256], sizes = [8, 128], strides = [1, 1]} : vector<8x512xf32> to vector<8x128xf32>
    %268 = math.tanh %267 : vector<8x128xf32>
    %269 = vector.extract_strided_slice %254 {offsets = [0, 384], sizes = [8, 128], strides = [1, 1]} : vector<8x512xf32> to vector<8x128xf32>
    %270 = arith.negf %269 : vector<8x128xf32>
    %271 = math.exp %270 : vector<8x128xf32>
    %cst_66 = arith.constant 1.000000e+00 : f32
    %272 = vector.broadcast %cst_66 : f32 to vector<8x128xf32>
    %273 = arith.addf %272, %271 : vector<8x128xf32>
    %274 = arith.divf %272, %273 : vector<8x128xf32>
    %275 = arith.mulf %266, %243 : vector<8x128xf32>
    %276 = arith.mulf %260, %268 : vector<8x128xf32>
    %277 = arith.addf %275, %276 : vector<8x128xf32>
    %278 = math.tanh %277 : vector<8x128xf32>
    %279 = arith.mulf %274, %278 : vector<8x128xf32>
    %280 = arith.index_cast %249 : i32 to index
    %c0_67 = arith.constant 0 : index
    %281 = vector.load %arg12[%280, %c0_67] : memref<64x128xf32, #tpu.memory_space<vmem>>, vector<8x128xf32>
    tpu.vector_store %arg12[%280, %c0_67], %279 {strides = array<i32>} : memref<64x128xf32, #tpu.memory_space<vmem>>, vector<8x128xf32>,
    %c8_i32_68 = arith.constant 8 : i32
    %c0_69 = arith.constant 0 : index
    %c0_70 = arith.constant 0 : index
    %282 = vector.load %arg9[%c0_69, %c0_70] : memref<8x128xf32, #tpu.memory_space<vmem>>, vector<8x128xf32>
    tpu.vector_store %arg9[%c0_69, %c0_70], %279 {strides = array<i32>} : memref<8x128xf32, #tpu.memory_space<vmem>>, vector<8x128xf32>,
    %c0_71 = arith.constant 0 : index
    %c0_72 = arith.constant 0 : index
    %283 = vector.load %arg10[%c0_71, %c0_72] : memref<8x128xf32, #tpu.memory_space<vmem>>, vector<8x128xf32>
    tpu.vector_store %arg10[%c0_71, %c0_72], %277 {strides = array<i32>} : memref<8x128xf32, #tpu.memory_space<vmem>>, vector<8x128xf32>,
    %c0_73 = arith.constant 0 : index
    %c0_74 = arith.constant 0 : index
    %284 = vector.load %arg12[%c0_73, %c0_74] : memref<64x128xf32, #tpu.memory_space<vmem>>, vector<64x128xf32>
    %285 = vector.shape_cast %284 : vector<64x128xf32> to vector<8x8x128xf32>
    %286 = tpu.transpose %285, [1, 0, 2] : vector<8x8x128xf32> -> vector<8x8x128xf32>
    %287 = vector.shape_cast %286 : vector<8x8x128xf32> to vector<64x128xf32>
    %288 = arith.truncf %287 : vector<64x128xf32> to vector<64x128xbf16>
    %c0_75 = arith.constant 0 : index
    %c0_76 = arith.constant 0 : index
    %289 = vector.load %arg6[%c0_75, %c0_76] : memref<128x256xbf16, #tpu.memory_space<vmem>>, vector<128x256xbf16>
    %cst_77 = arith.constant dense<0.000000e+00> : vector<64x256xf32>
    %290 = tpu.matmul %288, %289, %cst_77 {dimension_numbers = #tpu.dot_dimension_numbers<[1], [0], [0], [1], [0, 0, 1, 1], [], []>} : vector<64x128xbf16>, vector<128x256xbf16>, vector<64x256xf32> -> vector<64x256xf32>
    %c0_78 = arith.constant 0 : index
    %c0_79 = arith.constant 0 : index
    %291 = vector.load %arg7[%c0_78, %c0_79] : memref<1x256xf32, #tpu.memory_space<vmem>>, vector<1x256xf32>
    %292 = vector.broadcast %291 : vector<1x256xf32> to vector<64x256xf32>
    %293 = arith.addf %290, %292 : vector<64x256xf32>
    %c0_80 = arith.constant 0 : index
    %c0_81 = arith.constant 0 : index
    %294 = vector.load %arg8[%c0_80, %c0_81] : memref<64x256xf32, #tpu.memory_space<vmem>>, vector<64x256xf32>
    tpu.vector_store %arg8[%c0_80, %c0_81], %293 {strides = array<i32>} : memref<64x256xf32, #tpu.memory_space<vmem>>, vector<64x256xf32>,
    return
  }
}

</mosaic_0001>

<llo_original>
// kernel: tpu_custom_call.1
$region0: #{tpu_custom_call.1}
  #allocation0 [shape = 'u32[]', space=smem, size = 0x4, offset = 0x4, fixed_abs, tag = 'smem constant byte address 0x4 - core index']
  #allocation1 [shape = 'u32[144,128]{1,0:T(1,128)}', space=vmem, size = 0x12000, scoped, tag = 'internal scratch']
  #allocation2 [shape = 'f32[64,512]{1,0:T(8,128)}', space=vmem, size = 0x20000, scoped, tag = 'scratch operand']
  #allocation3 [shape = 'f32[64,128]{1,0:T(8,128)}', space=vmem, size = 0x8000, scoped, tag = 'scratch operand']
  %s0 = inlined_call_operand.hbm [shape: bf16[64,128], index: 0, kind: input, shape index: {}]
  %s1 = inlined_call_operand.hbm [shape: f32[8,128], index: 1, kind: input, shape index: {}]
  %s2 = inlined_call_operand.hbm [shape: f32[8,128], index: 2, kind: input, shape index: {}]
  %s3 = inlined_call_operand.hbm [shape: bf16[128,512], index: 3, kind: input, shape index: {}]
  %s4 = inlined_call_operand.hbm [shape: bf16[128,512], index: 4, kind: input, shape index: {}]
  %s5 = inlined_call_operand.vmem [shape: f32[1,512], index: 5, kind: input, shape index: {}]
  %s6 = inlined_call_operand.hbm [shape: bf16[128,256], index: 6, kind: input, shape index: {}]
  %s7 = inlined_call_operand.vmem [shape: f32[1,256], index: 7, kind: input, shape index: {}]
  %s8 = inlined_call_operand.hbm [shape: f32[64,256], index: 8, kind: output, shape index: {0}]
  %s9 = inlined_call_operand.hbm [shape: f32[8,128], index: 9, kind: output, shape index: {1}]
  %s10 = inlined_call_operand.hbm [shape: f32[8,128], index: 10, kind: output, shape index: {2}]
  %11 = xla_tuple %s8, %s9, %s10
  %s12 = sld [smem:[#allocation0]]
  $region82: #{tpu_custom_call.1} parent=0
    _
  %s14 = ssub.s32 1, %s12
  %s15 = scalar_select 0, %s14, %s12
  $region1: #{tpu_custom_call.1} parent=0
    #allocation4 [shape = 'u8[16384]{0}', space=vmem, size = 0x4000, scoped, tag = 'input window, operand 0, single buffered']
    #allocation5 [shape = 's32[1]{0}', space=sflag, size = 0x4, scoped, tag = 'scoped memory for tpu_custom_call.1']
    #allocation6 [shape = 's32[1]{0}', space=sflag, size = 0x4, scoped, tag = 'scoped memory for tpu_custom_call.1']
    #allocation7 [shape = 'u8[4096]{0}', space=vmem, size = 0x1000, scoped, tag = 'input window, operand 1, single buffered']
    #allocation8 [shape = 's32[1]{0}', space=sflag, size = 0x4, scoped, tag = 'scoped memory for tpu_custom_call.1']
    #allocation9 [shape = 'u8[4096]{0}', space=vmem, size = 0x1000, scoped, tag = 'input window, operand 2, single buffered']
    #allocation10 [shape = 'u8[131072]{0}', space=vmem, size = 0x20000, scoped, tag = 'input window, operand 3, single buffered']
    #allocation11 [shape = 's32[1]{0}', space=sflag, size = 0x4, scoped, tag = 'scoped memory for tpu_custom_call.1']
    #allocation12 [shape = 'u8[131072]{0}', space=vmem, size = 0x20000, scoped, tag = 'input window, operand 4, single buffered']
    #allocation13 [shape = 'u8[65536]{0}', space=vmem, size = 0x10000, scoped, tag = 'input window, operand 6, single buffered']
    #allocation14 [shape = 's32[1]{0}', space=sflag, size = 0x4, scoped, tag = 'scoped memory for tpu_custom_call.1']
    #allocation15 [shape = 'u8[65536]{0}', space=vmem, size = 0x10000, scoped, tag = 'output window, operand 0, single buffered']
    #allocation16 [shape = 'u8[4096]{0}', space=vmem, size = 0x1000, scoped, tag = 'output window, operand 1, single buffered']
    #allocation17 [shape = 's32[1]{0}', space=sflag, size = 0x4, scoped, tag = 'scoped memory for tpu_custom_call.1']
    #allocation18 [shape = 'u8[4096]{0}', space=vmem, size = 0x1000, scoped, tag = 'output window, operand 2, single buffered']
    %16 = vsyncpa [#allocation5], 0
    %17 = vsyncpa [#allocation8], 0
    %18 = vsyncpa [#allocation11], 0
    %19 = vsyncpa [#allocation14], 0
    %20 = vsyncpa [#allocation6], 0
    %21 = vsyncpa [#allocation17], 0
    // Predicated region
    $region2: #{tpu_custom_call.1} parent=1 // pred_check
      _
    $region3: #{tpu_custom_call.1} parent=1 // pred_check_branch
      %23 = sbr.rel (0) target = $region5
    $region4: #{tpu_custom_call.1} parent=1 // pred_region
      %s25 = ssub.s32 512, 512
      %26 = vsyncadd [#allocation5], %s25
      %s27 = sshll.u32 [#allocation4], 4
      %s28 = int_to_ptr.vmem [resolvable:$true] %s27
      %33 = dma.hbm_to_vmem [thread:$0]  %s0, 512, %s28, [#allocation5], 64, 64, 4
    $region5: #{tpu_custom_call.1} parent=1 // pred_fallthru
      _
    // Predicated region
    $region6: #{tpu_custom_call.1} parent=1 // pred_check
      _
    $region7: #{tpu_custom_call.1} parent=1 // pred_check_branch
      %35 = sbr.rel (0) target = $region9
    $region8: #{tpu_custom_call.1} parent=1 // pred_region
      %s37 = ssub.s32 128, 128
      %38 = vsyncadd [#allocation8], %s37
      %s40 = sshll.u32 [#allocation7], 4
      %s41 = int_to_ptr.vmem [resolvable:$true] %s40
      %43 = dma.hbm_to_vmem [thread:$0]  %s1, 128, %s41, [#allocation8]
    $region9: #{tpu_custom_call.1} parent=1 // pred_fallthru
      _
    // Predicated region
    $region10: #{tpu_custom_call.1} parent=1 // pred_check
      _
    $region11: #{tpu_custom_call.1} parent=1 // pred_check_branch
      %45 = sbr.rel (0) target = $region13
    $region12: #{tpu_custom_call.1} parent=1 // pred_region
      %s47 = ssub.s32 128, 128
      %48 = vsyncadd [#allocation8], %s47
      %s50 = sshll.u32 [#allocation9], 4
      %s51 = int_to_ptr.vmem [resolvable:$true] %s50
      %53 = dma.hbm_to_vmem [thread:$0]  %s2, 128, %s51, [#allocation8]
    $region13: #{tpu_custom_call.1} parent=1 // pred_fallthru
      _
    // Predicated region
    $region14: #{tpu_custom_call.1} parent=1 // pred_check
      _
    $region15: #{tpu_custom_call.1} parent=1 // pred_check_branch
      %55 = sbr.rel (0) target = $region17
    $region16: #{tpu_custom_call.1} parent=1 // pred_region
      %s57 = ssub.s32 4096, 4096
      %58 = vsyncadd [#allocation11], %s57
      %s59 = sshll.u32 [#allocation10], 4
      %s60 = int_to_ptr.vmem [resolvable:$true] %s59
      %65 = dma.hbm_to_vmem [thread:$0]  %s3, 4096, %s60, [#allocation11], 256, 256, 16
    $region17: #{tpu_custom_call.1} parent=1 // pred_fallthru
      _
    // Predicated region
    $region18: #{tpu_custom_call.1} parent=1 // pred_check
      _
    $region19: #{tpu_custom_call.1} parent=1 // pred_check_branch
      %67 = sbr.rel (0) target = $region21
    $region20: #{tpu_custom_call.1} parent=1 // pred_region
      %s69 = ssub.s32 4096, 4096
      %70 = vsyncadd [#allocation11], %s69
      %s71 = sshll.u32 [#allocation12], 4
      %s72 = int_to_ptr.vmem [resolvable:$true] %s71
      %77 = dma.hbm_to_vmem [thread:$0]  %s4, 4096, %s72, [#allocation11], 256, 256, 16
    $region21: #{tpu_custom_call.1} parent=1 // pred_fallthru
      _
    // Predicated region
    $region22: #{tpu_custom_call.1} parent=1 // pred_check
      _
    $region23: #{tpu_custom_call.1} parent=1 // pred_check_branch
      %79 = sbr.rel (0) target = $region25
    $region24: #{tpu_custom_call.1} parent=1 // pred_region
      _
    $region25: #{tpu_custom_call.1} parent=1 // pred_fallthru
      _
    // Predicated region
    $region26: #{tpu_custom_call.1} parent=1 // pred_check
      _
    $region27: #{tpu_custom_call.1} parent=1 // pred_check_branch
      %81 = sbr.rel (0) target = $region29
    $region28: #{tpu_custom_call.1} parent=1 // pred_region
      %s83 = ssub.s32 2048, 2048
      %84 = vsyncadd [#allocation14], %s83
      %s85 = sshll.u32 [#allocation13], 4
      %s86 = int_to_ptr.vmem [resolvable:$true] %s85
      %91 = dma.hbm_to_vmem [thread:$0]  %s6, 2048, %s86, [#allocation14], 128, 128, 8
    $region29: #{tpu_custom_call.1} parent=1 // pred_fallthru
      _
    // Predicated region
    $region30: #{tpu_custom_call.1} parent=1 // pred_check
      _
    $region31: #{tpu_custom_call.1} parent=1 // pred_check_branch
      %93 = sbr.rel (0) target = $region33
    $region32: #{tpu_custom_call.1} parent=1 // pred_region
      _
    $region33: #{tpu_custom_call.1} parent=1 // pred_fallthru
      _
    // Predicated region
    $region34: #{tpu_custom_call.1} parent=1 // pred_check
      _
    $region35: #{tpu_custom_call.1} parent=1 // pred_check_branch
      %95 = sbr.rel (0) target = $region37
    $region36: #{tpu_custom_call.1} parent=1 // pred_region
      %96 = dma.done [#allocation5], 512
    $region37: #{tpu_custom_call.1} parent=1 // pred_fallthru
      _
    // Predicated region
    $region38: #{tpu_custom_call.1} parent=1 // pred_check
      _
    $region39: #{tpu_custom_call.1} parent=1 // pred_check_branch
      %98 = sbr.rel (0) target = $region41
    $region40: #{tpu_custom_call.1} parent=1 // pred_region
      %99 = dma.done [#allocation8], 128
    $region41: #{tpu_custom_call.1} parent=1 // pred_fallthru
      _
    // Predicated region
    $region42: #{tpu_custom_call.1} parent=1 // pred_check
      _
    $region43: #{tpu_custom_call.1} parent=1 // pred_check_branch
      %101 = sbr.rel (0) target = $region45
    $region44: #{tpu_custom_call.1} parent=1 // pred_region
      %102 = dma.done [#allocation8], 128
    $region45: #{tpu_custom_call.1} parent=1 // pred_fallthru
      _
    // Predicated region
    $region46: #{tpu_custom_call.1} parent=1 // pred_check
      _
    $region47: #{tpu_custom_call.1} parent=1 // pred_check_branch
      %104 = sbr.rel (0) target = $region49
    $region48: #{tpu_custom_call.1} parent=1 // pred_region
      %105 = dma.done [#allocation11], 4096
    $region49: #{tpu_custom_call.1} parent=1 // pred_fallthru
      _
    // Predicated region
    $region50: #{tpu_custom_call.1} parent=1 // pred_check
      _
    $region51: #{tpu_custom_call.1} parent=1 // pred_check_branch
      %107 = sbr.rel (0) target = $region53
    $region52: #{tpu_custom_call.1} parent=1 // pred_region
      %108 = dma.done [#allocation11], 4096
    $region53: #{tpu_custom_call.1} parent=1 // pred_fallthru
      _
    // Predicated region
    $region54: #{tpu_custom_call.1} parent=1 // pred_check
      _
    $region55: #{tpu_custom_call.1} parent=1 // pred_check_branch
      %110 = sbr.rel (0) target = $region57
    $region56: #{tpu_custom_call.1} parent=1 // pred_region
      %111 = dma.done [#allocation14], 2048
    $region57: #{tpu_custom_call.1} parent=1 // pred_fallthru
      _
    %v113 = vld [vmem:[#allocation4] sm:$0xf]
    %v114 = vld [vmem:[#allocation4 + $0x4] sm:$0xf]
    %v115 = vld [vmem:[#allocation4 + $0x8] sm:$0xf]
    %v116 = vld [vmem:[#allocation4 + $0xc] sm:$0xf]
    %v117 = vld [vmem:[#allocation4 + $0x10] sm:$0xf]
    %v118 = vld [vmem:[#allocation4 + $0x14] sm:$0xf]
    %v119 = vld [vmem:[#allocation4 + $0x18] sm:$0xf]
    %v120 = vld [vmem:[#allocation4 + $0x1c] sm:$0xf]
    %v121 = vld [vmem:[#allocation10] sm:$0xff]
    %v122 = vld [vmem:[#allocation10 + $0x8] sm:$0xff]
    %v123 = vld [vmem:[#allocation10 + $0x10] sm:$0xff]
    %v124 = vld [vmem:[#allocation10 + $0x18] sm:$0xff]
    %v125 = vld [vmem:[#allocation10 + $0x20] sm:$0xff]
    %v126 = vld [vmem:[#allocation10 + $0x28] sm:$0xff]
    %v127 = vld [vmem:[#allocation10 + $0x30] sm:$0xff]
    %v128 = vld [vmem:[#allocation10 + $0x38] sm:$0xff]
    %v129 = vld [vmem:[#allocation10 + $0x40] sm:$0xff]
    %v130 = vld [vmem:[#allocation10 + $0x48] sm:$0xff]
    %v131 = vld [vmem:[#allocation10 + $0x50] sm:$0xff]
    %v132 = vld [vmem:[#allocation10 + $0x58] sm:$0xff]
    %v133 = vld [vmem:[#allocation10 + $0x60] sm:$0xff]
    %v134 = vld [vmem:[#allocation10 + $0x68] sm:$0xff]
    %v135 = vld [vmem:[#allocation10 + $0x70] sm:$0xff]
    %v136 = vld [vmem:[#allocation10 + $0x78] sm:$0xff]
    %v137 = vld [vmem:[#allocation10 + $0x80] sm:$0xff]
    %v138 = vld [vmem:[#allocation10 + $0x88] sm:$0xff]
    %v139 = vld [vmem:[#allocation10 + $0x90] sm:$0xff]
    %v140 = vld [vmem:[#allocation10 + $0x98] sm:$0xff]
    %v141 = vld [vmem:[#allocation10 + $0xa0] sm:$0xff]
    %v142 = vld [vmem:[#allocation10 + $0xa8] sm:$0xff]
    %v143 = vld [vmem:[#allocation10 + $0xb0] sm:$0xff]
    %v144 = vld [vmem:[#allocation10 + $0xb8] sm:$0xff]
    %v145 = vld [vmem:[#allocation10 + $0xc0] sm:$0xff]
    %v146 = vld [vmem:[#allocation10 + $0xc8] sm:$0xff]
    %v147 = vld [vmem:[#allocation10 + $0xd0] sm:$0xff]
    %v148 = vld [vmem:[#allocation10 + $0xd8] sm:$0xff]
    %v149 = vld [vmem:[#allocation10 + $0xe0] sm:$0xff]
    %v150 = vld [vmem:[#allocation10 + $0xe8] sm:$0xff]
    %v151 = vld [vmem:[#allocation10 + $0xf0] sm:$0xff]
    %v152 = vld [vmem:[#allocation10 + $0xf8] sm:$0xff]
    %v153 = vld [vmem:[%s5] sm:$0xf]
    %v155 = vlaneseq
    %v156 = vshrl.u32 %v155, 7
    %v157 = vsub.s32 0, %v156
    %v158 = vrot.slane %v153, %v157
    %v159 = vlaneseq
    %v160 = vshrl.u32 %v159, 7
    %v161 = vsub.s32 1, %v160
    %v162 = vrot.slane %v153, %v161
    %v163 = vlaneseq
    %v164 = vshrl.u32 %v163, 7
    %v165 = vsub.s32 2, %v164
    %v166 = vrot.slane %v153, %v165
    %v167 = vlaneseq
    %v168 = vshrl.u32 %v167, 7
    %v169 = vsub.s32 3, %v168
    %v170 = vrot.slane %v153, %v169
    %v183 = vunpack.c.l.b16 %v113
    %v184 = vunpack.c.l.b16 %v114
    %v185 = vunpack.c.l.b16 %v115
    %v186 = vunpack.c.l.b16 %v116
    %v187 = vunpack.c.l.b16 %v117
    %v188 = vunpack.c.l.b16 %v118
    %v189 = vunpack.c.l.b16 %v119
    %v190 = vunpack.c.l.b16 %v120
    %v191 = vpack.c.b16 %v184, %v183
    %v192 = vpack.c.b16 %v186, %v185
    %v193 = vpack.c.b16 %v188, %v187
    %v194 = vpack.c.b16 %v190, %v189
    %v231 = vunpack.c.l.b16 %v121
    %v232 = vunpack.c.h.b16 %v121
    %v233 = vunpack.c.l.b16 %v122
    %v234 = vunpack.c.h.b16 %v122
    %v235 = vunpack.c.l.b16 %v123
    %v236 = vunpack.c.h.b16 %v123
    %v237 = vunpack.c.l.b16 %v124
    %v238 = vunpack.c.h.b16 %v124
    %v239 = vunpack.c.l.b16 %v125
    %v240 = vunpack.c.h.b16 %v125
    %v241 = vunpack.c.l.b16 %v126
    %v242 = vunpack.c.h.b16 %v126
    %v243 = vunpack.c.l.b16 %v127
    %v244 = vunpack.c.h.b16 %v127
    %v245 = vunpack.c.l.b16 %v128
    %v246 = vunpack.c.h.b16 %v128
    %v247 = vunpack.c.l.b16 %v129
    %v248 = vunpack.c.h.b16 %v129
    %v249 = vunpack.c.l.b16 %v130
    %v250 = vunpack.c.h.b16 %v130
    %v251 = vunpack.c.l.b16 %v131
    %v252 = vunpack.c.h.b16 %v131
    %v253 = vunpack.c.l.b16 %v132
    %v254 = vunpack.c.h.b16 %v132
    %v255 = vunpack.c.l.b16 %v133
    %v256 = vunpack.c.h.b16 %v133
    %v257 = vunpack.c.l.b16 %v134
    %v258 = vunpack.c.h.b16 %v134
    %v259 = vunpack.c.l.b16 %v135
    %v260 = vunpack.c.h.b16 %v135
    %v261 = vunpack.c.l.b16 %v136
    %v262 = vunpack.c.h.b16 %v136
    %v263 = vunpack.c.l.b16 %v137
    %v264 = vunpack.c.h.b16 %v137
    %v265 = vunpack.c.l.b16 %v138
    %v266 = vunpack.c.h.b16 %v138
    %v267 = vunpack.c.l.b16 %v139
    %v268 = vunpack.c.h.b16 %v139
    %v269 = vunpack.c.l.b16 %v140
    %v270 = vunpack.c.h.b16 %v140
    %v271 = vunpack.c.l.b16 %v141
    %v272 = vunpack.c.h.b16 %v141
    %v273 = vunpack.c.l.b16 %v142
    %v274 = vunpack.c.h.b16 %v142
    %v275 = vunpack.c.l.b16 %v143
    %v276 = vunpack.c.h.b16 %v143
    %v277 = vunpack.c.l.b16 %v144
    %v278 = vunpack.c.h.b16 %v144
    %v279 = vunpack.c.l.b16 %v145
    %v280 = vunpack.c.h.b16 %v145
    %v281 = vunpack.c.l.b16 %v146
    %v282 = vunpack.c.h.b16 %v146
    %v283 = vunpack.c.l.b16 %v147
    %v284 = vunpack.c.h.b16 %v147
    %v285 = vunpack.c.l.b16 %v148
    %v286 = vunpack.c.h.b16 %v148
    %v287 = vunpack.c.l.b16 %v149
    %v288 = vunpack.c.h.b16 %v149
    %v289 = vunpack.c.l.b16 %v150
    %v290 = vunpack.c.h.b16 %v150
    %v291 = vunpack.c.l.b16 %v151
    %v292 = vunpack.c.h.b16 %v151
    %v293 = vunpack.c.l.b16 %v152
    %v294 = vunpack.c.h.b16 %v152
    %v295 = vpack.c.b16 %v235, %v231
    %v296 = vpack.c.b16 %v236, %v232
    %v297 = vpack.c.b16 %v237, %v233
    %v298 = vpack.c.b16 %v238, %v234
    %v299 = vpack.c.b16 %v243, %v239
    %v300 = vpack.c.b16 %v244, %v240
    %v301 = vpack.c.b16 %v245, %v241
    %v302 = vpack.c.b16 %v246, %v242
    %v303 = vpack.c.b16 %v251, %v247
    %v304 = vpack.c.b16 %v252, %v248
    %v305 = vpack.c.b16 %v253, %v249
    %v306 = vpack.c.b16 %v254, %v250
    %v307 = vpack.c.b16 %v259, %v255
    %v308 = vpack.c.b16 %v260, %v256
    %v309 = vpack.c.b16 %v261, %v257
    %v310 = vpack.c.b16 %v262, %v258
    %v311 = vpack.c.b16 %v267, %v263
    %v312 = vpack.c.b16 %v268, %v264
    %v313 = vpack.c.b16 %v269, %v265
    %v314 = vpack.c.b16 %v270, %v266
    %v315 = vpack.c.b16 %v275, %v271
    %v316 = vpack.c.b16 %v276, %v272
    %v317 = vpack.c.b16 %v277, %v273
    %v318 = vpack.c.b16 %v278, %v274
    %v319 = vpack.c.b16 %v283, %v279
    %v320 = vpack.c.b16 %v284, %v280
    %v321 = vpack.c.b16 %v285, %v281
    %v322 = vpack.c.b16 %v286, %v282
    %v323 = vpack.c.b16 %v291, %v287
    %v324 = vpack.c.b16 %v292, %v288
    %v325 = vpack.c.b16 %v293, %v289
    %v326 = vpack.c.b16 %v294, %v290
    %359 = vmatprep.subr.bf16.mxu0 %v324
    %360 = vmatpush1.bf16.msra.mxu0 %v323
    %361 = vmatprep.subr.bf16.mxu0 %v320
    %362 = vmatpush1.bf16.msra.mxu0 %v319
    %363 = vmatprep.subr.bf16.mxu0 %v316
    %364 = vmatpush1.bf16.msra.mxu0 %v315
    %365 = vmatprep.subr.bf16.mxu0 %v312
    %366 = vmatpush1.bf16.msra.mxu0 %v311
    %367 = vmatprep.subr.bf16.mxu0 %v308
    %368 = vmatpush1.bf16.msra.mxu0 %v307
    %369 = vmatprep.subr.bf16.mxu0 %v304
    %370 = vmatpush1.bf16.msra.mxu0 %v303
    %371 = vmatprep.subr.bf16.mxu0 %v300
    %372 = vmatpush1.bf16.msra.mxu0 %v299
    %373 = vmatprep.subr.bf16.mxu0 %v296
    %374 = vmatpush1.bf16.msra.mxu0 %v295
    %375 = vmatprep.subr.bf16.mxu0 0
    %376 = vmatpush2.bf16.msra.mxu0 0
    %377 = vmatprep.subr.bf16.mxu0 0
    %378 = vmatpush2.bf16.msra.mxu0 0
    %379 = vmatprep.subr.bf16.mxu0 0
    %380 = vmatpush2.bf16.msra.mxu0 0
    %381 = vmatprep.subr.bf16.mxu0 0
    %382 = vmatpush2.bf16.msra.mxu0 0
    %383 = vmatprep.subr.bf16.mxu0 0
    %384 = vmatpush2.bf16.msra.mxu0 0
    %385 = vmatprep.subr.bf16.mxu0 0
    %386 = vmatpush2.bf16.msra.mxu0 0
    %387 = vmatprep.subr.bf16.mxu0 0
    %388 = vmatpush2.bf16.msra.mxu0 0
    %389 = vmatprep.subr.bf16.mxu0 0
    %390 = vmatpush2.bf16.msra.mxu0 0
    %391 = vmatprep.mubr.bf16.mxu0 0
    %392 = vmatmul.mubr.bf16.gmra.mxu0 %v191
    %v393 = vpop.f32.mrf.mxu0
    %v394 = vadd.f32 %v158, %v393
    %v395 = vpop.f32.mrf.mxu0
    %v396 = vadd.f32 %v162, %v395
    %v397 = vpop.f32.mrf.mxu0
    %v398 = vadd.f32 %v158, %v397
    %v399 = vpop.f32.mrf.mxu0
    %v400 = vadd.f32 %v162, %v399
    %401 = vmatprep.mubr.bf16.mxu0 0
    %402 = vmatmul.mubr.bf16.gmra.mxu0 %v192
    %v403 = vpop.f32.mrf.mxu0
    %v404 = vadd.f32 %v158, %v403
    %v405 = vpop.f32.mrf.mxu0
    %v406 = vadd.f32 %v162, %v405
    %v407 = vpop.f32.mrf.mxu0
    %v408 = vadd.f32 %v158, %v407
    %v409 = vpop.f32.mrf.mxu0
    %v410 = vadd.f32 %v162, %v409
    %411 = vmatprep.mubr.bf16.mxu0 0
    %412 = vmatmul.mubr.bf16.gmra.mxu0 %v193
    %v413 = vpop.f32.mrf.mxu0
    %v414 = vadd.f32 %v158, %v413
    %v415 = vpop.f32.mrf.mxu0
    %v416 = vadd.f32 %v162, %v415
    %v417 = vpop.f32.mrf.mxu0
    %v418 = vadd.f32 %v158, %v417
    %v419 = vpop.f32.mrf.mxu0
    %v420 = vadd.f32 %v162, %v419
    %421 = vmatprep.mubr.bf16.mxu0 0
    %422 = vmatmul.mubr.bf16.gmra.mxu0 %v194
    %v423 = vpop.f32.mrf.mxu0
    %v424 = vadd.f32 %v158, %v423
    %v425 = vpop.f32.mrf.mxu0
    %v426 = vadd.f32 %v162, %v425
    %v427 = vpop.f32.mrf.mxu0
    %v428 = vadd.f32 %v158, %v427
    %v429 = vpop.f32.mrf.mxu0
    %v430 = vadd.f32 %v162, %v429
    %431 = vdwg.mxu0
    %432 = vmatprep.subr.bf16.mxu0 %v326
    %433 = vmatpush1.bf16.msra.mxu0 %v325
    %434 = vmatprep.subr.bf16.mxu0 %v322
    %435 = vmatpush1.bf16.msra.mxu0 %v321
    %436 = vmatprep.subr.bf16.mxu0 %v318
    %437 = vmatpush1.bf16.msra.mxu0 %v317
    %438 = vmatprep.subr.bf16.mxu0 %v314
    %439 = vmatpush1.bf16.msra.mxu0 %v313
    %440 = vmatprep.subr.bf16.mxu0 %v310
    %441 = vmatpush1.bf16.msra.mxu0 %v309
    %442 = vmatprep.subr.bf16.mxu0 %v306
    %443 = vmatpush1.bf16.msra.mxu0 %v305
    %444 = vmatprep.subr.bf16.mxu0 %v302
    %445 = vmatpush1.bf16.msra.mxu0 %v301
    %446 = vmatprep.subr.bf16.mxu0 %v298
    %447 = vmatpush1.bf16.msra.mxu0 %v297
    %448 = vmatprep.subr.bf16.mxu0 0
    %449 = vmatpush2.bf16.msra.mxu0 0
    %450 = vmatprep.subr.bf16.mxu0 0
    %451 = vmatpush2.bf16.msra.mxu0 0
    %452 = vmatprep.subr.bf16.mxu0 0
    %453 = vmatpush2.bf16.msra.mxu0 0
    %454 = vmatprep.subr.bf16.mxu0 0
    %455 = vmatpush2.bf16.msra.mxu0 0
    %456 = vmatprep.subr.bf16.mxu0 0
    %457 = vmatpush2.bf16.msra.mxu0 0
    %458 = vmatprep.subr.bf16.mxu0 0
    %459 = vmatpush2.bf16.msra.mxu0 0
    %460 = vmatprep.subr.bf16.mxu0 0
    %461 = vmatpush2.bf16.msra.mxu0 0
    %462 = vmatprep.subr.bf16.mxu0 0
    %463 = vmatpush2.bf16.msra.mxu0 0
    %464 = vmatprep.mubr.bf16.mxu0 0
    %465 = vmatmul.mubr.bf16.gmra.mxu0 %v191
    %v466 = vpop.f32.mrf.mxu0
    %v467 = vadd.f32 %v166, %v466
    %v468 = vpop.f32.mrf.mxu0
    %v469 = vadd.f32 %v170, %v468
    %v470 = vpop.f32.mrf.mxu0
    %v471 = vadd.f32 %v166, %v470
    %v472 = vpop.f32.mrf.mxu0
    %v473 = vadd.f32 %v170, %v472
    %474 = vmatprep.mubr.bf16.mxu0 0
    %475 = vmatmul.mubr.bf16.gmra.mxu0 %v192
    %v476 = vpop.f32.mrf.mxu0
    %v477 = vadd.f32 %v166, %v476
    %v478 = vpop.f32.mrf.mxu0
    %v479 = vadd.f32 %v170, %v478
    %v480 = vpop.f32.mrf.mxu0
    %v481 = vadd.f32 %v166, %v480
    %v482 = vpop.f32.mrf.mxu0
    %v483 = vadd.f32 %v170, %v482
    %484 = vmatprep.mubr.bf16.mxu0 0
    %485 = vmatmul.mubr.bf16.gmra.mxu0 %v193
    %v486 = vpop.f32.mrf.mxu0
    %v487 = vadd.f32 %v166, %v486
    %v488 = vpop.f32.mrf.mxu0
    %v489 = vadd.f32 %v170, %v488
    %v490 = vpop.f32.mrf.mxu0
    %v491 = vadd.f32 %v166, %v490
    %v492 = vpop.f32.mrf.mxu0
    %v493 = vadd.f32 %v170, %v492
    %494 = vmatprep.mubr.bf16.mxu0 0
    %495 = vmatmul.mubr.bf16.gmra.mxu0 %v194
    %v496 = vpop.f32.mrf.mxu0
    %v497 = vadd.f32 %v166, %v496
    %v498 = vpop.f32.mrf.mxu0
    %v499 = vadd.f32 %v170, %v498
    %v500 = vpop.f32.mrf.mxu0
    %v501 = vadd.f32 %v166, %v500
    %v502 = vpop.f32.mrf.mxu0
    %v503 = vadd.f32 %v170, %v502
    %504 = vdwg.mxu0
    %505 = vst [vmem:[#allocation2] sm:$0xff] %v394
    %506 = vst [vmem:[#allocation2 + $0x8] sm:$0xff] %v396
    %507 = vst [vmem:[#allocation2 + $0x10] sm:$0xff] %v467
    %508 = vst [vmem:[#allocation2 + $0x18] sm:$0xff] %v469
    %509 = vst [vmem:[#allocation2 + $0x20] sm:$0xff] %v398
    %510 = vst [vmem:[#allocation2 + $0x28] sm:$0xff] %v400
    %511 = vst [vmem:[#allocation2 + $0x30] sm:$0xff] %v471
    %512 = vst [vmem:[#allocation2 + $0x38] sm:$0xff] %v473
    %513 = vst [vmem:[#allocation2 + $0x40] sm:$0xff] %v404
    %514 = vst [vmem:[#allocation2 + $0x48] sm:$0xff] %v406
    %515 = vst [vmem:[#allocation2 + $0x50] sm:$0xff] %v477
    %516 = vst [vmem:[#allocation2 + $0x58] sm:$0xff] %v479
    %517 = vst [vmem:[#allocation2 + $0x60] sm:$0xff] %v408
    %518 = vst [vmem:[#allocation2 + $0x68] sm:$0xff] %v410
    %519 = vst [vmem:[#allocation2 + $0x70] sm:$0xff] %v481
    %520 = vst [vmem:[#allocation2 + $0x78] sm:$0xff] %v483
    %521 = vst [vmem:[#allocation2 + $0x80] sm:$0xff] %v414
    %522 = vst [vmem:[#allocation2 + $0x88] sm:$0xff] %v416
    %523 = vst [vmem:[#allocation2 + $0x90] sm:$0xff] %v487
    %524 = vst [vmem:[#allocation2 + $0x98] sm:$0xff] %v489
    %525 = vst [vmem:[#allocation2 + $0xa0] sm:$0xff] %v418
    %526 = vst [vmem:[#allocation2 + $0xa8] sm:$0xff] %v420
    %527 = vst [vmem:[#allocation2 + $0xb0] sm:$0xff] %v491
    %528 = vst [vmem:[#allocation2 + $0xb8] sm:$0xff] %v493
    %529 = vst [vmem:[#allocation2 + $0xc0] sm:$0xff] %v424
    %530 = vst [vmem:[#allocation2 + $0xc8] sm:$0xff] %v426
    %531 = vst [vmem:[#allocation2 + $0xd0] sm:$0xff] %v497
    %532 = vst [vmem:[#allocation2 + $0xd8] sm:$0xff] %v499
    %533 = vst [vmem:[#allocation2 + $0xe0] sm:$0xff] %v428
    %534 = vst [vmem:[#allocation2 + $0xe8] sm:$0xff] %v430
    %535 = vst [vmem:[#allocation2 + $0xf0] sm:$0xff] %v501
    %536 = vst [vmem:[#allocation2 + $0xf8] sm:$0xff] %v503
    %v537 = vld [vmem:[#allocation12] sm:$0xff]
    %v538 = vld [vmem:[#allocation12 + $0x8] sm:$0xff]
    %v539 = vld [vmem:[#allocation12 + $0x10] sm:$0xff]
    %v540 = vld [vmem:[#allocation12 + $0x18] sm:$0xff]
    %v541 = vld [vmem:[#allocation12 + $0x20] sm:$0xff]
    %v542 = vld [vmem:[#allocation12 + $0x28] sm:$0xff]
    %v543 = vld [vmem:[#allocation12 + $0x30] sm:$0xff]
    %v544 = vld [vmem:[#allocation12 + $0x38] sm:$0xff]
    %v545 = vld [vmem:[#allocation12 + $0x40] sm:$0xff]
    %v546 = vld [vmem:[#allocation12 + $0x48] sm:$0xff]
    %v547 = vld [vmem:[#allocation12 + $0x50] sm:$0xff]
    %v548 = vld [vmem:[#allocation12 + $0x58] sm:$0xff]
    %v549 = vld [vmem:[#allocation12 + $0x60] sm:$0xff]
    %v550 = vld [vmem:[#allocation12 + $0x68] sm:$0xff]
    %v551 = vld [vmem:[#allocation12 + $0x70] sm:$0xff]
    %v552 = vld [vmem:[#allocation12 + $0x78] sm:$0xff]
    %v553 = vld [vmem:[#allocation12 + $0x80] sm:$0xff]
    %v554 = vld [vmem:[#allocation12 + $0x88] sm:$0xff]
    %v555 = vld [vmem:[#allocation12 + $0x90] sm:$0xff]
    %v556 = vld [vmem:[#allocation12 + $0x98] sm:$0xff]
    %v557 = vld [vmem:[#allocation12 + $0xa0] sm:$0xff]
    %v558 = vld [vmem:[#allocation12 + $0xa8] sm:$0xff]
    %v559 = vld [vmem:[#allocation12 + $0xb0] sm:$0xff]
    %v560 = vld [vmem:[#allocation12 + $0xb8] sm:$0xff]
    %v561 = vld [vmem:[#allocation12 + $0xc0] sm:$0xff]
    %v562 = vld [vmem:[#allocation12 + $0xc8] sm:$0xff]
    %v563 = vld [vmem:[#allocation12 + $0xd0] sm:$0xff]
    %v564 = vld [vmem:[#allocation12 + $0xd8] sm:$0xff]
    %v565 = vld [vmem:[#allocation12 + $0xe0] sm:$0xff]
    %v566 = vld [vmem:[#allocation12 + $0xe8] sm:$0xff]
    %v567 = vld [vmem:[#allocation12 + $0xf0] sm:$0xff]
    %v568 = vld [vmem:[#allocation12 + $0xf8] sm:$0xff]
    %v569 = vld [vmem:[#allocation7] sm:$0xff]
    %v570 = vld [vmem:[#allocation9] sm:$0xff]
    %s571 = smul.u32 0, 4
    %s572 = smul.addr %s571, 8
    %s573 = scalar_lea.vmem [#allocation2], %s572
    %v574 = vld [vmem:[%s573] sm:$0xff]
    %v575 = vld [vmem:[%s573 + $0x8] sm:$0xff]
    %v576 = vld [vmem:[%s573 + $0x10] sm:$0xff]
    %v577 = vld [vmem:[%s573 + $0x18] sm:$0xff]
    %v578 = vpack.c.bf16 %v569, %v569
    %v611 = vunpack.c.l.b16 %v537
    %v612 = vunpack.c.h.b16 %v537
    %v613 = vunpack.c.l.b16 %v538
    %v614 = vunpack.c.h.b16 %v538
    %v615 = vunpack.c.l.b16 %v539
    %v616 = vunpack.c.h.b16 %v539
    %v617 = vunpack.c.l.b16 %v540
    %v618 = vunpack.c.h.b16 %v540
    %v619 = vunpack.c.l.b16 %v541
    %v620 = vunpack.c.h.b16 %v541
    %v621 = vunpack.c.l.b16 %v542
    %v622 = vunpack.c.h.b16 %v542
    %v623 = vunpack.c.l.b16 %v543
    %v624 = vunpack.c.h.b16 %v543
    %v625 = vunpack.c.l.b16 %v544
    %v626 = vunpack.c.h.b16 %v544
    %v627 = vunpack.c.l.b16 %v545
    %v628 = vunpack.c.h.b16 %v545
    %v629 = vunpack.c.l.b16 %v546
    %v630 = vunpack.c.h.b16 %v546
    %v631 = vunpack.c.l.b16 %v547
    %v632 = vunpack.c.h.b16 %v547
    %v633 = vunpack.c.l.b16 %v548
    %v634 = vunpack.c.h.b16 %v548
    %v635 = vunpack.c.l.b16 %v549
    %v636 = vunpack.c.h.b16 %v549
    %v637 = vunpack.c.l.b16 %v550
    %v638 = vunpack.c.h.b16 %v550
    %v639 = vunpack.c.l.b16 %v551
    %v640 = vunpack.c.h.b16 %v551
    %v641 = vunpack.c.l.b16 %v552
    %v642 = vunpack.c.h.b16 %v552
    %v643 = vunpack.c.l.b16 %v553
    %v644 = vunpack.c.h.b16 %v553
    %v645 = vunpack.c.l.b16 %v554
    %v646 = vunpack.c.h.b16 %v554
    %v647 = vunpack.c.l.b16 %v555
    %v648 = vunpack.c.h.b16 %v555
    %v649 = vunpack.c.l.b16 %v556
    %v650 = vunpack.c.h.b16 %v556
    %v651 = vunpack.c.l.b16 %v557
    %v652 = vunpack.c.h.b16 %v557
    %v653 = vunpack.c.l.b16 %v558
    %v654 = vunpack.c.h.b16 %v558
    %v655 = vunpack.c.l.b16 %v559
    %v656 = vunpack.c.h.b16 %v559
    %v657 = vunpack.c.l.b16 %v560
    %v658 = vunpack.c.h.b16 %v560
    %v659 = vunpack.c.l.b16 %v561
    %v660 = vunpack.c.h.b16 %v561
    %v661 = vunpack.c.l.b16 %v562
    %v662 = vunpack.c.h.b16 %v562
    %v663 = vunpack.c.l.b16 %v563
    %v664 = vunpack.c.h.b16 %v563
    %v665 = vunpack.c.l.b16 %v564
    %v666 = vunpack.c.h.b16 %v564
    %v667 = vunpack.c.l.b16 %v565
    %v668 = vunpack.c.h.b16 %v565
    %v669 = vunpack.c.l.b16 %v566
    %v670 = vunpack.c.h.b16 %v566
    %v671 = vunpack.c.l.b16 %v567
    %v672 = vunpack.c.h.b16 %v567
    %v673 = vunpack.c.l.b16 %v568
    %v674 = vunpack.c.h.b16 %v568
    %v675 = vpack.c.b16 %v615, %v611
    %v676 = vpack.c.b16 %v616, %v612
    %v677 = vpack.c.b16 %v617, %v613
    %v678 = vpack.c.b16 %v618, %v614
    %v679 = vpack.c.b16 %v623, %v619
    %v680 = vpack.c.b16 %v624, %v620
    %v681 = vpack.c.b16 %v625, %v621
    %v682 = vpack.c.b16 %v626, %v622
    %v683 = vpack.c.b16 %v631, %v627
    %v684 = vpack.c.b16 %v632, %v628
    %v685 = vpack.c.b16 %v633, %v629
    %v686 = vpack.c.b16 %v634, %v630
    %v687 = vpack.c.b16 %v639, %v635
    %v688 = vpack.c.b16 %v640, %v636
    %v689 = vpack.c.b16 %v641, %v637
    %v690 = vpack.c.b16 %v642, %v638
    %v691 = vpack.c.b16 %v647, %v643
    %v692 = vpack.c.b16 %v648, %v644
    %v693 = vpack.c.b16 %v649, %v645
    %v694 = vpack.c.b16 %v650, %v646
    %v695 = vpack.c.b16 %v655, %v651
    %v696 = vpack.c.b16 %v656, %v652
    %v697 = vpack.c.b16 %v657, %v653
    %v698 = vpack.c.b16 %v658, %v654
    %v699 = vpack.c.b16 %v663, %v659
    %v700 = vpack.c.b16 %v664, %v660
    %v701 = vpack.c.b16 %v665, %v661
    %v702 = vpack.c.b16 %v666, %v662
    %v703 = vpack.c.b16 %v671, %v667
    %v704 = vpack.c.b16 %v672, %v668
    %v705 = vpack.c.b16 %v673, %v669
    %v706 = vpack.c.b16 %v674, %v670
    %739 = vmatprep.subr.bf16.mxu0 %v704
    %740 = vmatpush1.bf16.msra.mxu0 %v703
    %741 = vmatprep.subr.bf16.mxu0 %v700
    %742 = vmatpush1.bf16.msra.mxu0 %v699
    %743 = vmatprep.subr.bf16.mxu0 %v696
    %744 = vmatpush1.bf16.msra.mxu0 %v695
    %745 = vmatprep.subr.bf16.mxu0 %v692
    %746 = vmatpush1.bf16.msra.mxu0 %v691
    %747 = vmatprep.subr.bf16.mxu0 %v688
    %748 = vmatpush1.bf16.msra.mxu0 %v687
    %749 = vmatprep.subr.bf16.mxu0 %v684
    %750 = vmatpush1.bf16.msra.mxu0 %v683
    %751 = vmatprep.subr.bf16.mxu0 %v680
    %752 = vmatpush1.bf16.msra.mxu0 %v679
    %753 = vmatprep.subr.bf16.mxu0 %v676
    %754 = vmatpush1.bf16.msra.mxu0 %v675
    %755 = vmatprep.subr.bf16.mxu0 0
    %756 = vmatpush2.bf16.msra.mxu0 0
    %757 = vmatprep.subr.bf16.mxu0 0
    %758 = vmatpush2.bf16.msra.mxu0 0
    %759 = vmatprep.subr.bf16.mxu0 0
    %760 = vmatpush2.bf16.msra.mxu0 0
    %761 = vmatprep.subr.bf16.mxu0 0
    %762 = vmatpush2.bf16.msra.mxu0 0
    %763 = vmatprep.subr.bf16.mxu0 0
    %764 = vmatpush2.bf16.msra.mxu0 0
    %765 = vmatprep.subr.bf16.mxu0 0
    %766 = vmatpush2.bf16.msra.mxu0 0
    %767 = vmatprep.subr.bf16.mxu0 0
    %768 = vmatpush2.bf16.msra.mxu0 0
    %769 = vmatprep.subr.bf16.mxu0 0
    %770 = vmatpush2.bf16.msra.mxu0 0
    %771 = vmatprep.mubr.bf16.mxu0 0
    %772 = vmatmul.mubr.bf16.gmra.mxu0 %v578
    %v773 = vpop.f32.mrf.mxu0
    %v774 = vadd.f32 0.0, %v773
    %v775 = vpop.f32.mrf.mxu0
    %v776 = vadd.f32 0.0, %v775
    %v777 = vpop.f32.mrf.mxu0
    %v778 = vpop.f32.mrf.mxu0
    %779 = vdwg.mxu0
    %780 = vmatprep.subr.bf16.mxu0 %v706
    %781 = vmatpush1.bf16.msra.mxu0 %v705
    %782 = vmatprep.subr.bf16.mxu0 %v702
    %783 = vmatpush1.bf16.msra.mxu0 %v701
    %784 = vmatprep.subr.bf16.mxu0 %v698
    %785 = vmatpush1.bf16.msra.mxu0 %v697
    %786 = vmatprep.subr.bf16.mxu0 %v694
    %787 = vmatpush1.bf16.msra.mxu0 %v693
    %788 = vmatprep.subr.bf16.mxu0 %v690
    %789 = vmatpush1.bf16.msra.mxu0 %v689
    %790 = vmatprep.subr.bf16.mxu0 %v686
    %791 = vmatpush1.bf16.msra.mxu0 %v685
    %792 = vmatprep.subr.bf16.mxu0 %v682
    %793 = vmatpush1.bf16.msra.mxu0 %v681
    %794 = vmatprep.subr.bf16.mxu0 %v678
    %795 = vmatpush1.bf16.msra.mxu0 %v677
    %796 = vmatprep.subr.bf16.mxu0 0
    %797 = vmatpush2.bf16.msra.mxu0 0
    %798 = vmatprep.subr.bf16.mxu0 0
    %799 = vmatpush2.bf16.msra.mxu0 0
    %800 = vmatprep.subr.bf16.mxu0 0
    %801 = vmatpush2.bf16.msra.mxu0 0
    %802 = vmatprep.subr.bf16.mxu0 0
    %803 = vmatpush2.bf16.msra.mxu0 0
    %804 = vmatprep.subr.bf16.mxu0 0
    %805 = vmatpush2.bf16.msra.mxu0 0
    %806 = vmatprep.subr.bf16.mxu0 0
    %807 = vmatpush2.bf16.msra.mxu0 0
    %808 = vmatprep.subr.bf16.mxu0 0
    %809 = vmatpush2.bf16.msra.mxu0 0
    %810 = vmatprep.subr.bf16.mxu0 0
    %811 = vmatpush2.bf16.msra.mxu0 0
    %812 = vmatprep.mubr.bf16.mxu0 0
    %813 = vmatmul.mubr.bf16.gmra.mxu0 %v578
    %v814 = vpop.f32.mrf.mxu0
    %v815 = vadd.f32 0.0, %v814
    %v816 = vpop.f32.mrf.mxu0
    %v817 = vadd.f32 0.0, %v816
    %v818 = vpop.f32.mrf.mxu0
    %v819 = vpop.f32.mrf.mxu0
    %820 = vdwg.mxu0
    %v821 = vadd.f32 %v574, %v774
    %v822 = vadd.f32 %v575, %v776
    %v823 = vadd.f32 %v576, %v815
    %v824 = vadd.f32 %v577, %v817
    %v825 = vxor.u32 %v821, 2147483648
    %v826 = vmul.f32 %v825, 1.442695
    %v827 = vpow.pop %v826
    %v828 = vadd.f32 %v827, 1.0
    %v829 = vrcp.pop %v828
    %v830 = vmul.f32 1.0, %v829
    %v831 = vxor.u32 %v822, 2147483648
    %v832 = vmul.f32 %v831, 1.442695
    %v833 = vpow.pop %v832
    %v834 = vadd.f32 %v833, 1.0
    %v835 = vrcp.pop %v834
    %v836 = vmul.f32 1.0, %v835
    %v837 = vtanh.pop %v823
    %v838 = vxor.u32 %v824, 2147483648
    %v839 = vmul.f32 %v838, 1.442695
    %v840 = vpow.pop %v839
    %v841 = vadd.f32 %v840, 1.0
    %v842 = vrcp.pop %v841
    %v843 = vmul.f32 1.0, %v842
    %v844 = vmul.f32 %v836, %v570
    %v845 = vmul.f32 %v830, %v837
    %v846 = vadd.f32 %v844, %v845
    %v847 = vtanh.pop %v846
    %v848 = vmul.f32 %v843, %v847
    %849 = vst [vmem:[#allocation3] sm:$0xff] %v848
    %s850 = smul.u32 1, 4
    %s851 = smul.addr %s850, 8
    %s852 = scalar_lea.vmem [#allocation2], %s851
    %v853 = vld [vmem:[%s852] sm:$0xff]
    %v854 = vld [vmem:[%s852 + $0x8] sm:$0xff]
    %v855 = vld [vmem:[%s852 + $0x10] sm:$0xff]
    %v856 = vld [vmem:[%s852 + $0x18] sm:$0xff]
    %v857 = vpack.c.bf16 %v848, %v848
    %858 = vmatprep.subr.bf16.mxu0 %v704
    %859 = vmatpush1.bf16.msra.mxu0 %v703
    %860 = vmatprep.subr.bf16.mxu0 %v700
    %861 = vmatpush1.bf16.msra.mxu0 %v699
    %862 = vmatprep.subr.bf16.mxu0 %v696
    %863 = vmatpush1.bf16.msra.mxu0 %v695
    %864 = vmatprep.subr.bf16.mxu0 %v692
    %865 = vmatpush1.bf16.msra.mxu0 %v691
    %866 = vmatprep.subr.bf16.mxu0 %v688
    %867 = vmatpush1.bf16.msra.mxu0 %v687
    %868 = vmatprep.subr.bf16.mxu0 %v684
    %869 = vmatpush1.bf16.msra.mxu0 %v683
    %870 = vmatprep.subr.bf16.mxu0 %v680
    %871 = vmatpush1.bf16.msra.mxu0 %v679
    %872 = vmatprep.subr.bf16.mxu0 %v676
    %873 = vmatpush1.bf16.msra.mxu0 %v675
    %874 = vmatprep.subr.bf16.mxu0 0
    %875 = vmatpush2.bf16.msra.mxu0 0
    %876 = vmatprep.subr.bf16.mxu0 0
    %877 = vmatpush2.bf16.msra.mxu0 0
    %878 = vmatprep.subr.bf16.mxu0 0
    %879 = vmatpush2.bf16.msra.mxu0 0
    %880 = vmatprep.subr.bf16.mxu0 0
    %881 = vmatpush2.bf16.msra.mxu0 0
    %882 = vmatprep.subr.bf16.mxu0 0
    %883 = vmatpush2.bf16.msra.mxu0 0
    %884 = vmatprep.subr.bf16.mxu0 0
    %885 = vmatpush2.bf16.msra.mxu0 0
    %886 = vmatprep.subr.bf16.mxu0 0
    %887 = vmatpush2.bf16.msra.mxu0 0
    %888 = vmatprep.subr.bf16.mxu0 0
    %889 = vmatpush2.bf16.msra.mxu0 0
    %890 = vmatprep.mubr.bf16.mxu0 0
    %891 = vmatmul.mubr.bf16.gmra.mxu0 %v857
    %v892 = vpop.f32.mrf.mxu0
    %v893 = vadd.f32 0.0, %v892
    %v894 = vpop.f32.mrf.mxu0
    %v895 = vadd.f32 0.0, %v894
    %v896 = vpop.f32.mrf.mxu0
    %v897 = vpop.f32.mrf.mxu0
    %898 = vdwg.mxu0
    %899 = vmatprep.subr.bf16.mxu0 %v706
    %900 = vmatpush1.bf16.msra.mxu0 %v705
    %901 = vmatprep.subr.bf16.mxu0 %v702
    %902 = vmatpush1.bf16.msra.mxu0 %v701
    %903 = vmatprep.subr.bf16.mxu0 %v698
    %904 = vmatpush1.bf16.msra.mxu0 %v697
    %905 = vmatprep.subr.bf16.mxu0 %v694
    %906 = vmatpush1.bf16.msra.mxu0 %v693
    %907 = vmatprep.subr.bf16.mxu0 %v690
    %908 = vmatpush1.bf16.msra.mxu0 %v689
    %909 = vmatprep.subr.bf16.mxu0 %v686
    %910 = vmatpush1.bf16.msra.mxu0 %v685
    %911 = vmatprep.subr.bf16.mxu0 %v682
    %912 = vmatpush1.bf16.msra.mxu0 %v681
    %913 = vmatprep.subr.bf16.mxu0 %v678
    %914 = vmatpush1.bf16.msra.mxu0 %v677
    %915 = vmatprep.subr.bf16.mxu0 0
    %916 = vmatpush2.bf16.msra.mxu0 0
    %917 = vmatprep.subr.bf16.mxu0 0
    %918 = vmatpush2.bf16.msra.mxu0 0
    %919 = vmatprep.subr.bf16.mxu0 0
    %920 = vmatpush2.bf16.msra.mxu0 0
    %921 = vmatprep.subr.bf16.mxu0 0
    %922 = vmatpush2.bf16.msra.mxu0 0
    %923 = vmatprep.subr.bf16.mxu0 0
    %924 = vmatpush2.bf16.msra.mxu0 0
    %925 = vmatprep.subr.bf16.mxu0 0
    %926 = vmatpush2.bf16.msra.mxu0 0
    %927 = vmatprep.subr.bf16.mxu0 0
    %928 = vmatpush2.bf16.msra.mxu0 0
    %929 = vmatprep.subr.bf16.mxu0 0
    %930 = vmatpush2.bf16.msra.mxu0 0
    %931 = vmatprep.mubr.bf16.mxu0 0
    %932 = vmatmul.mubr.bf16.gmra.mxu0 %v857
    %v933 = vpop.f32.mrf.mxu0
    %v934 = vadd.f32 0.0, %v933
    %v935 = vpop.f32.mrf.mxu0
    %v936 = vadd.f32 0.0, %v935
    %v937 = vpop.f32.mrf.mxu0
    %v938 = vpop.f32.mrf.mxu0
    %939 = vdwg.mxu0
    %v940 = vadd.f32 %v853, %v893
    %v941 = vadd.f32 %v854, %v895
    %v942 = vadd.f32 %v855, %v934
    %v943 = vadd.f32 %v856, %v936
    %v944 = vxor.u32 %v940, 2147483648
    %v945 = vmul.f32 %v944, 1.442695
    %v946 = vpow.pop %v945
    %v947 = vadd.f32 %v946, 1.0
    %v948 = vrcp.pop %v947
    %v949 = vmul.f32 1.0, %v948
    %v950 = vxor.u32 %v941, 2147483648
    %v951 = vmul.f32 %v950, 1.442695
    %v952 = vpow.pop %v951
    %v953 = vadd.f32 %v952, 1.0
    %v954 = vrcp.pop %v953
    %v955 = vmul.f32 1.0, %v954
    %v956 = vtanh.pop %v942
    %v957 = vxor.u32 %v943, 2147483648
    %v958 = vmul.f32 %v957, 1.442695
    %v959 = vpow.pop %v958
    %v960 = vadd.f32 %v959, 1.0
    %v961 = vrcp.pop %v960
    %v962 = vmul.f32 1.0, %v961
    %v963 = vmul.f32 %v955, %v846
    %v964 = vmul.f32 %v949, %v956
    %v965 = vadd.f32 %v963, %v964
    %v966 = vtanh.pop %v965
    %v967 = vmul.f32 %v962, %v966
    %s968 = scalar_lea.vmem [#allocation3], 8
    %969 = vst [vmem:[%s968] sm:$0xff] %v967
    %s970 = smul.u32 2, 4
    %s971 = smul.addr %s970, 8
    %s972 = scalar_lea.vmem [#allocation2], %s971
    %v973 = vld [vmem:[%s972] sm:$0xff]
    %v974 = vld [vmem:[%s972 + $0x8] sm:$0xff]
    %v975 = vld [vmem:[%s972 + $0x10] sm:$0xff]
    %v976 = vld [vmem:[%s972 + $0x18] sm:$0xff]
    %v977 = vpack.c.bf16 %v967, %v967
    %978 = vmatprep.subr.bf16.mxu0 %v704
    %979 = vmatpush1.bf16.msra.mxu0 %v703
    %980 = vmatprep.subr.bf16.mxu0 %v700
    %981 = vmatpush1.bf16.msra.mxu0 %v699
    %982 = vmatprep.subr.bf16.mxu0 %v696
    %983 = vmatpush1.bf16.msra.mxu0 %v695
    %984 = vmatprep.subr.bf16.mxu0 %v692
    %985 = vmatpush1.bf16.msra.mxu0 %v691
    %986 = vmatprep.subr.bf16.mxu0 %v688
    %987 = vmatpush1.bf16.msra.mxu0 %v687
    %988 = vmatprep.subr.bf16.mxu0 %v684
    %989 = vmatpush1.bf16.msra.mxu0 %v683
    %990 = vmatprep.subr.bf16.mxu0 %v680
    %991 = vmatpush1.bf16.msra.mxu0 %v679
    %992 = vmatprep.subr.bf16.mxu0 %v676
    %993 = vmatpush1.bf16.msra.mxu0 %v675
    %994 = vmatprep.subr.bf16.mxu0 0
    %995 = vmatpush2.bf16.msra.mxu0 0
    %996 = vmatprep.subr.bf16.mxu0 0
    %997 = vmatpush2.bf16.msra.mxu0 0
    %998 = vmatprep.subr.bf16.mxu0 0
    %999 = vmatpush2.bf16.msra.mxu0 0
    %1000 = vmatprep.subr.bf16.mxu0 0
    %1001 = vmatpush2.bf16.msra.mxu0 0
    %1002 = vmatprep.subr.bf16.mxu0 0
    %1003 = vmatpush2.bf16.msra.mxu0 0
    %1004 = vmatprep.subr.bf16.mxu0 0
    %1005 = vmatpush2.bf16.msra.mxu0 0
    %1006 = vmatprep.subr.bf16.mxu0 0
    %1007 = vmatpush2.bf16.msra.mxu0 0
    %1008 = vmatprep.subr.bf16.mxu0 0
    %1009 = vmatpush2.bf16.msra.mxu0 0
    %1010 = vmatprep.mubr.bf16.mxu0 0
    %1011 = vmatmul.mubr.bf16.gmra.mxu0 %v977
    %v1012 = vpop.f32.mrf.mxu0
    %v1013 = vadd.f32 0.0, %v1012
    %v1014 = vpop.f32.mrf.mxu0
    %v1015 = vadd.f32 0.0, %v1014
    %v1016 = vpop.f32.mrf.mxu0
    %v1017 = vpop.f32.mrf.mxu0
    %1018 = vdwg.mxu0
    %1019 = vmatprep.subr.bf16.mxu0 %v706
    %1020 = vmatpush1.bf16.msra.mxu0 %v705
    %1021 = vmatprep.subr.bf16.mxu0 %v702
    %1022 = vmatpush1.bf16.msra.mxu0 %v701
    %1023 = vmatprep.subr.bf16.mxu0 %v698
    %1024 = vmatpush1.bf16.msra.mxu0 %v697
    %1025 = vmatprep.subr.bf16.mxu0 %v694
    %1026 = vmatpush1.bf16.msra.mxu0 %v693
    %1027 = vmatprep.subr.bf16.mxu0 %v690
    %1028 = vmatpush1.bf16.msra.mxu0 %v689
    %1029 = vmatprep.subr.bf16.mxu0 %v686
    %1030 = vmatpush1.bf16.msra.mxu0 %v685
    %1031 = vmatprep.subr.bf16.mxu0 %v682
    %1032 = vmatpush1.bf16.msra.mxu0 %v681
    %1033 = vmatprep.subr.bf16.mxu0 %v678
    %1034 = vmatpush1.bf16.msra.mxu0 %v677
    %1035 = vmatprep.subr.bf16.mxu0 0
    %1036 = vmatpush2.bf16.msra.mxu0 0
    %1037 = vmatprep.subr.bf16.mxu0 0
    %1038 = vmatpush2.bf16.msra.mxu0 0
    %1039 = vmatprep.subr.bf16.mxu0 0
    %1040 = vmatpush2.bf16.msra.mxu0 0
    %1041 = vmatprep.subr.bf16.mxu0 0
    %1042 = vmatpush2.bf16.msra.mxu0 0
    %1043 = vmatprep.subr.bf16.mxu0 0
    %1044 = vmatpush2.bf16.msra.mxu0 0
    %1045 = vmatprep.subr.bf16.mxu0 0
    %1046 = vmatpush2.bf16.msra.mxu0 0
    %1047 = vmatprep.subr.bf16.mxu0 0
    %1048 = vmatpush2.bf16.msra.mxu0 0
    %1049 = vmatprep.subr.bf16.mxu0 0
    %1050 = vmatpush2.bf16.msra.mxu0 0
    %1051 = vmatprep.mubr.bf16.mxu0 0
    %1052 = vmatmul.mubr.bf16.gmra.mxu0 %v977
    %v1053 = vpop.f32.mrf.mxu0
    %v1054 = vadd.f32 0.0, %v1053
    %v1055 = vpop.f32.mrf.mxu0
    %v1056 = vadd.f32 0.0, %v1055
    %v1057 = vpop.f32.mrf.mxu0
    %v1058 = vpop.f32.mrf.mxu0
    %1059 = vdwg.mxu0
    %v1060 = vadd.f32 %v973, %v1013
    %v1061 = vadd.f32 %v974, %v1015
    %v1062 = vadd.f32 %v975, %v1054
    %v1063 = vadd.f32 %v976, %v1056
    %v1064 = vxor.u32 %v1060, 2147483648
    %v1065 = vmul.f32 %v1064, 1.442695
    %v1066 = vpow.pop %v1065
    %v1067 = vadd.f32 %v1066, 1.0
    %v1068 = vrcp.pop %v1067
    %v1069 = vmul.f32 1.0, %v1068
    %v1070 = vxor.u32 %v1061, 2147483648
    %v1071 = vmul.f32 %v1070, 1.442695
    %v1072 = vpow.pop %v1071
    %v1073 = vadd.f32 %v1072, 1.0
    %v1074 = vrcp.pop %v1073
    %v1075 = vmul.f32 1.0, %v1074
    %v1076 = vtanh.pop %v1062
    %v1077 = vxor.u32 %v1063, 2147483648
    %v1078 = vmul.f32 %v1077, 1.442695
    %v1079 = vpow.pop %v1078
    %v1080 = vadd.f32 %v1079, 1.0
    %v1081 = vrcp.pop %v1080
    %v1082 = vmul.f32 1.0, %v1081
    %v1083 = vmul.f32 %v1075, %v965
    %v1084 = vmul.f32 %v1069, %v1076
    %v1085 = vadd.f32 %v1083, %v1084
    %v1086 = vtanh.pop %v1085
    %v1087 = vmul.f32 %v1082, %v1086
    %s1088 = scalar_lea.vmem [#allocation3], 16
    %1089 = vst [vmem:[%s1088] sm:$0xff] %v1087
    %s1090 = smul.u32 3, 4
    %s1091 = smul.addr %s1090, 8
    %s1092 = scalar_lea.vmem [#allocation2], %s1091
    %v1093 = vld [vmem:[%s1092] sm:$0xff]
    %v1094 = vld [vmem:[%s1092 + $0x8] sm:$0xff]
    %v1095 = vld [vmem:[%s1092 + $0x10] sm:$0xff]
    %v1096 = vld [vmem:[%s1092 + $0x18] sm:$0xff]
    %v1097 = vpack.c.bf16 %v1087, %v1087
    %1098 = vmatprep.subr.bf16.mxu0 %v704
    %1099 = vmatpush1.bf16.msra.mxu0 %v703
    %1100 = vmatprep.subr.bf16.mxu0 %v700
    %1101 = vmatpush1.bf16.msra.mxu0 %v699
    %1102 = vmatprep.subr.bf16.mxu0 %v696
    %1103 = vmatpush1.bf16.msra.mxu0 %v695
    %1104 = vmatprep.subr.bf16.mxu0 %v692
    %1105 = vmatpush1.bf16.msra.mxu0 %v691
    %1106 = vmatprep.subr.bf16.mxu0 %v688
    %1107 = vmatpush1.bf16.msra.mxu0 %v687
    %1108 = vmatprep.subr.bf16.mxu0 %v684
    %1109 = vmatpush1.bf16.msra.mxu0 %v683
    %1110 = vmatprep.subr.bf16.mxu0 %v680
    %1111 = vmatpush1.bf16.msra.mxu0 %v679
    %1112 = vmatprep.subr.bf16.mxu0 %v676
    %1113 = vmatpush1.bf16.msra.mxu0 %v675
    %1114 = vmatprep.subr.bf16.mxu0 0
    %1115 = vmatpush2.bf16.msra.mxu0 0
    %1116 = vmatprep.subr.bf16.mxu0 0
    %1117 = vmatpush2.bf16.msra.mxu0 0
    %1118 = vmatprep.subr.bf16.mxu0 0
    %1119 = vmatpush2.bf16.msra.mxu0 0
    %1120 = vmatprep.subr.bf16.mxu0 0
    %1121 = vmatpush2.bf16.msra.mxu0 0
    %1122 = vmatprep.subr.bf16.mxu0 0
    %1123 = vmatpush2.bf16.msra.mxu0 0
    %1124 = vmatprep.subr.bf16.mxu0 0
    %1125 = vmatpush2.bf16.msra.mxu0 0
    %1126 = vmatprep.subr.bf16.mxu0 0
    %1127 = vmatpush2.bf16.msra.mxu0 0
    %1128 = vmatprep.subr.bf16.mxu0 0
    %1129 = vmatpush2.bf16.msra.mxu0 0
    %1130 = vmatprep.mubr.bf16.mxu0 0
    %1131 = vmatmul.mubr.bf16.gmra.mxu0 %v1097
    %v1132 = vpop.f32.mrf.mxu0
    %v1133 = vadd.f32 0.0, %v1132
    %v1134 = vpop.f32.mrf.mxu0
    %v1135 = vadd.f32 0.0, %v1134
    %v1136 = vpop.f32.mrf.mxu0
    %v1137 = vpop.f32.mrf.mxu0
    %1138 = vdwg.mxu0
    %1139 = vmatprep.subr.bf16.mxu0 %v706
    %1140 = vmatpush1.bf16.msra.mxu0 %v705
    %1141 = vmatprep.subr.bf16.mxu0 %v702
    %1142 = vmatpush1.bf16.msra.mxu0 %v701
    %1143 = vmatprep.subr.bf16.mxu0 %v698
    %1144 = vmatpush1.bf16.msra.mxu0 %v697
    %1145 = vmatprep.subr.bf16.mxu0 %v694
    %1146 = vmatpush1.bf16.msra.mxu0 %v693
    %1147 = vmatprep.subr.bf16.mxu0 %v690
    %1148 = vmatpush1.bf16.msra.mxu0 %v689
    %1149 = vmatprep.subr.bf16.mxu0 %v686
    %1150 = vmatpush1.bf16.msra.mxu0 %v685
    %1151 = vmatprep.subr.bf16.mxu0 %v682
    %1152 = vmatpush1.bf16.msra.mxu0 %v681
    %1153 = vmatprep.subr.bf16.mxu0 %v678
    %1154 = vmatpush1.bf16.msra.mxu0 %v677
    %1155 = vmatprep.subr.bf16.mxu0 0
    %1156 = vmatpush2.bf16.msra.mxu0 0
    %1157 = vmatprep.subr.bf16.mxu0 0
    %1158 = vmatpush2.bf16.msra.mxu0 0
    %1159 = vmatprep.subr.bf16.mxu0 0
    %1160 = vmatpush2.bf16.msra.mxu0 0
    %1161 = vmatprep.subr.bf16.mxu0 0
    %1162 = vmatpush2.bf16.msra.mxu0 0
    %1163 = vmatprep.subr.bf16.mxu0 0
    %1164 = vmatpush2.bf16.msra.mxu0 0
    %1165 = vmatprep.subr.bf16.mxu0 0
    %1166 = vmatpush2.bf16.msra.mxu0 0
    %1167 = vmatprep.subr.bf16.mxu0 0
    %1168 = vmatpush2.bf16.msra.mxu0 0
    %1169 = vmatprep.subr.bf16.mxu0 0
    %1170 = vmatpush2.bf16.msra.mxu0 0
    %1171 = vmatprep.mubr.bf16.mxu0 0
    %1172 = vmatmul.mubr.bf16.gmra.mxu0 %v1097
    %v1173 = vpop.f32.mrf.mxu0
    %v1174 = vadd.f32 0.0, %v1173
    %v1175 = vpop.f32.mrf.mxu0
    %v1176 = vadd.f32 0.0, %v1175
    %v1177 = vpop.f32.mrf.mxu0
    %v1178 = vpop.f32.mrf.mxu0
    %1179 = vdwg.mxu0
    %v1180 = vadd.f32 %v1093, %v1133
    %v1181 = vadd.f32 %v1094, %v1135
    %v1182 = vadd.f32 %v1095, %v1174
    %v1183 = vadd.f32 %v1096, %v1176
    %v1184 = vxor.u32 %v1180, 2147483648
    %v1185 = vmul.f32 %v1184, 1.442695
    %v1186 = vpow.pop %v1185
    %v1187 = vadd.f32 %v1186, 1.0
    %v1188 = vrcp.pop %v1187
    %v1189 = vmul.f32 1.0, %v1188
    %v1190 = vxor.u32 %v1181, 2147483648
    %v1191 = vmul.f32 %v1190, 1.442695
    %v1192 = vpow.pop %v1191
    %v1193 = vadd.f32 %v1192, 1.0
    %v1194 = vrcp.pop %v1193
    %v1195 = vmul.f32 1.0, %v1194
    %v1196 = vtanh.pop %v1182
    %v1197 = vxor.u32 %v1183, 2147483648
    %v1198 = vmul.f32 %v1197, 1.442695
    %v1199 = vpow.pop %v1198
    %v1200 = vadd.f32 %v1199, 1.0
    %v1201 = vrcp.pop %v1200
    %v1202 = vmul.f32 1.0, %v1201
    %v1203 = vmul.f32 %v1195, %v1085
    %v1204 = vmul.f32 %v1189, %v1196
    %v1205 = vadd.f32 %v1203, %v1204
    %v1206 = vtanh.pop %v1205
    %v1207 = vmul.f32 %v1202, %v1206
    %s1208 = scalar_lea.vmem [#allocation3], 24
    %1209 = vst [vmem:[%s1208] sm:$0xff] %v1207
    %s1210 = smul.u32 4, 4
    %s1211 = smul.addr %s1210, 8
    %s1212 = scalar_lea.vmem [#allocation2], %s1211
    %v1213 = vld [vmem:[%s1212] sm:$0xff]
    %v1214 = vld [vmem:[%s1212 + $0x8] sm:$0xff]
    %v1215 = vld [vmem:[%s1212 + $0x10] sm:$0xff]
    %v1216 = vld [vmem:[%s1212 + $0x18] sm:$0xff]
    %v1217 = vpack.c.bf16 %v1207, %v1207
    %1218 = vmatprep.subr.bf16.mxu0 %v704
    %1219 = vmatpush1.bf16.msra.mxu0 %v703
    %1220 = vmatprep.subr.bf16.mxu0 %v700
    %1221 = vmatpush1.bf16.msra.mxu0 %v699
    %1222 = vmatprep.subr.bf16.mxu0 %v696
    %1223 = vmatpush1.bf16.msra.mxu0 %v695
    %1224 = vmatprep.subr.bf16.mxu0 %v692
    %1225 = vmatpush1.bf16.msra.mxu0 %v691
    %1226 = vmatprep.subr.bf16.mxu0 %v688
    %1227 = vmatpush1.bf16.msra.mxu0 %v687
    %1228 = vmatprep.subr.bf16.mxu0 %v684
    %1229 = vmatpush1.bf16.msra.mxu0 %v683
    %1230 = vmatprep.subr.bf16.mxu0 %v680
    %1231 = vmatpush1.bf16.msra.mxu0 %v679
    %1232 = vmatprep.subr.bf16.mxu0 %v676
    %1233 = vmatpush1.bf16.msra.mxu0 %v675
    %1234 = vmatprep.subr.bf16.mxu0 0
    %1235 = vmatpush2.bf16.msra.mxu0 0
    %1236 = vmatprep.subr.bf16.mxu0 0
    %1237 = vmatpush2.bf16.msra.mxu0 0
    %1238 = vmatprep.subr.bf16.mxu0 0
    %1239 = vmatpush2.bf16.msra.mxu0 0
    %1240 = vmatprep.subr.bf16.mxu0 0
    %1241 = vmatpush2.bf16.msra.mxu0 0
    %1242 = vmatprep.subr.bf16.mxu0 0
    %1243 = vmatpush2.bf16.msra.mxu0 0
    %1244 = vmatprep.subr.bf16.mxu0 0
    %1245 = vmatpush2.bf16.msra.mxu0 0
    %1246 = vmatprep.subr.bf16.mxu0 0
    %1247 = vmatpush2.bf16.msra.mxu0 0
    %1248 = vmatprep.subr.bf16.mxu0 0
    %1249 = vmatpush2.bf16.msra.mxu0 0
    %1250 = vmatprep.mubr.bf16.mxu0 0
    %1251 = vmatmul.mubr.bf16.gmra.mxu0 %v1217
    %v1252 = vpop.f32.mrf.mxu0
    %v1253 = vadd.f32 0.0, %v1252
    %v1254 = vpop.f32.mrf.mxu0
    %v1255 = vadd.f32 0.0, %v1254
    %v1256 = vpop.f32.mrf.mxu0
    %v1257 = vpop.f32.mrf.mxu0
    %1258 = vdwg.mxu0
    %1259 = vmatprep.subr.bf16.mxu0 %v706
    %1260 = vmatpush1.bf16.msra.mxu0 %v705
    %1261 = vmatprep.subr.bf16.mxu0 %v702
    %1262 = vmatpush1.bf16.msra.mxu0 %v701
    %1263 = vmatprep.subr.bf16.mxu0 %v698
    %1264 = vmatpush1.bf16.msra.mxu0 %v697
    %1265 = vmatprep.subr.bf16.mxu0 %v694
    %1266 = vmatpush1.bf16.msra.mxu0 %v693
    %1267 = vmatprep.subr.bf16.mxu0 %v690
    %1268 = vmatpush1.bf16.msra.mxu0 %v689
    %1269 = vmatprep.subr.bf16.mxu0 %v686
    %1270 = vmatpush1.bf16.msra.mxu0 %v685
    %1271 = vmatprep.subr.bf16.mxu0 %v682
    %1272 = vmatpush1.bf16.msra.mxu0 %v681
    %1273 = vmatprep.subr.bf16.mxu0 %v678
    %1274 = vmatpush1.bf16.msra.mxu0 %v677
    %1275 = vmatprep.subr.bf16.mxu0 0
    %1276 = vmatpush2.bf16.msra.mxu0 0
    %1277 = vmatprep.subr.bf16.mxu0 0
    %1278 = vmatpush2.bf16.msra.mxu0 0
    %1279 = vmatprep.subr.bf16.mxu0 0
    %1280 = vmatpush2.bf16.msra.mxu0 0
    %1281 = vmatprep.subr.bf16.mxu0 0
    %1282 = vmatpush2.bf16.msra.mxu0 0
    %1283 = vmatprep.subr.bf16.mxu0 0
    %1284 = vmatpush2.bf16.msra.mxu0 0
    %1285 = vmatprep.subr.bf16.mxu0 0
    %1286 = vmatpush2.bf16.msra.mxu0 0
    %1287 = vmatprep.subr.bf16.mxu0 0
    %1288 = vmatpush2.bf16.msra.mxu0 0
    %1289 = vmatprep.subr.bf16.mxu0 0
    %1290 = vmatpush2.bf16.msra.mxu0 0
    %1291 = vmatprep.mubr.bf16.mxu0 0
    %1292 = vmatmul.mubr.bf16.gmra.mxu0 %v1217
    %v1293 = vpop.f32.mrf.mxu0
    %v1294 = vadd.f32 0.0, %v1293
    %v1295 = vpop.f32.mrf.mxu0
    %v1296 = vadd.f32 0.0, %v1295
    %v1297 = vpop.f32.mrf.mxu0
    %v1298 = vpop.f32.mrf.mxu0
    %1299 = vdwg.mxu0
    %v1300 = vadd.f32 %v1213, %v1253
    %v1301 = vadd.f32 %v1214, %v1255
    %v1302 = vadd.f32 %v1215, %v1294
    %v1303 = vadd.f32 %v1216, %v1296
    %v1304 = vxor.u32 %v1300, 2147483648
    %v1305 = vmul.f32 %v1304, 1.442695
    %v1306 = vpow.pop %v1305
    %v1307 = vadd.f32 %v1306, 1.0
    %v1308 = vrcp.pop %v1307
    %v1309 = vmul.f32 1.0, %v1308
    %v1310 = vxor.u32 %v1301, 2147483648
    %v1311 = vmul.f32 %v1310, 1.442695
    %v1312 = vpow.pop %v1311
    %v1313 = vadd.f32 %v1312, 1.0
    %v1314 = vrcp.pop %v1313
    %v1315 = vmul.f32 1.0, %v1314
    %v1316 = vtanh.pop %v1302
    %v1317 = vxor.u32 %v1303, 2147483648
    %v1318 = vmul.f32 %v1317, 1.442695
    %v1319 = vpow.pop %v1318
    %v1320 = vadd.f32 %v1319, 1.0
    %v1321 = vrcp.pop %v1320
    %v1322 = vmul.f32 1.0, %v1321
    %v1323 = vmul.f32 %v1315, %v1205
    %v1324 = vmul.f32 %v1309, %v1316
    %v1325 = vadd.f32 %v1323, %v1324
    %v1326 = vtanh.pop %v1325
    %v1327 = vmul.f32 %v1322, %v1326
    %s1328 = scalar_lea.vmem [#allocation3], 32
    %1329 = vst [vmem:[%s1328] sm:$0xff] %v1327
    %s1330 = smul.u32 5, 4
    %s1331 = smul.addr %s1330, 8
    %s1332 = scalar_lea.vmem [#allocation2], %s1331
    %v1333 = vld [vmem:[%s1332] sm:$0xff]
    %v1334 = vld [vmem:[%s1332 + $0x8] sm:$0xff]
    %v1335 = vld [vmem:[%s1332 + $0x10] sm:$0xff]
    %v1336 = vld [vmem:[%s1332 + $0x18] sm:$0xff]
    %v1337 = vpack.c.bf16 %v1327, %v1327
    %1338 = vmatprep.subr.bf16.mxu0 %v704
    %1339 = vmatpush1.bf16.msra.mxu0 %v703
    %1340 = vmatprep.subr.bf16.mxu0 %v700
    %1341 = vmatpush1.bf16.msra.mxu0 %v699
    %1342 = vmatprep.subr.bf16.mxu0 %v696
    %1343 = vmatpush1.bf16.msra.mxu0 %v695
    %1344 = vmatprep.subr.bf16.mxu0 %v692
    %1345 = vmatpush1.bf16.msra.mxu0 %v691
    %1346 = vmatprep.subr.bf16.mxu0 %v688
    %1347 = vmatpush1.bf16.msra.mxu0 %v687
    %1348 = vmatprep.subr.bf16.mxu0 %v684
    %1349 = vmatpush1.bf16.msra.mxu0 %v683
    %1350 = vmatprep.subr.bf16.mxu0 %v680
    %1351 = vmatpush1.bf16.msra.mxu0 %v679
    %1352 = vmatprep.subr.bf16.mxu0 %v676
    %1353 = vmatpush1.bf16.msra.mxu0 %v675
    %1354 = vmatprep.subr.bf16.mxu0 0
    %1355 = vmatpush2.bf16.msra.mxu0 0
    %1356 = vmatprep.subr.bf16.mxu0 0
    %1357 = vmatpush2.bf16.msra.mxu0 0
    %1358 = vmatprep.subr.bf16.mxu0 0
    %1359 = vmatpush2.bf16.msra.mxu0 0
    %1360 = vmatprep.subr.bf16.mxu0 0
    %1361 = vmatpush2.bf16.msra.mxu0 0
    %1362 = vmatprep.subr.bf16.mxu0 0
    %1363 = vmatpush2.bf16.msra.mxu0 0
    %1364 = vmatprep.subr.bf16.mxu0 0
    %1365 = vmatpush2.bf16.msra.mxu0 0
    %1366 = vmatprep.subr.bf16.mxu0 0
    %1367 = vmatpush2.bf16.msra.mxu0 0
    %1368 = vmatprep.subr.bf16.mxu0 0
    %1369 = vmatpush2.bf16.msra.mxu0 0
    %1370 = vmatprep.mubr.bf16.mxu0 0
    %1371 = vmatmul.mubr.bf16.gmra.mxu0 %v1337
    %v1372 = vpop.f32.mrf.mxu0
    %v1373 = vadd.f32 0.0, %v1372
    %v1374 = vpop.f32.mrf.mxu0
    %v1375 = vadd.f32 0.0, %v1374
    %v1376 = vpop.f32.mrf.mxu0
    %v1377 = vpop.f32.mrf.mxu0
    %1378 = vdwg.mxu0
    %1379 = vmatprep.subr.bf16.mxu0 %v706
    %1380 = vmatpush1.bf16.msra.mxu0 %v705
    %1381 = vmatprep.subr.bf16.mxu0 %v702
    %1382 = vmatpush1.bf16.msra.mxu0 %v701
    %1383 = vmatprep.subr.bf16.mxu0 %v698
    %1384 = vmatpush1.bf16.msra.mxu0 %v697
    %1385 = vmatprep.subr.bf16.mxu0 %v694
    %1386 = vmatpush1.bf16.msra.mxu0 %v693
    %1387 = vmatprep.subr.bf16.mxu0 %v690
    %1388 = vmatpush1.bf16.msra.mxu0 %v689
    %1389 = vmatprep.subr.bf16.mxu0 %v686
    %1390 = vmatpush1.bf16.msra.mxu0 %v685
    %1391 = vmatprep.subr.bf16.mxu0 %v682
    %1392 = vmatpush1.bf16.msra.mxu0 %v681
    %1393 = vmatprep.subr.bf16.mxu0 %v678
    %1394 = vmatpush1.bf16.msra.mxu0 %v677
    %1395 = vmatprep.subr.bf16.mxu0 0
    %1396 = vmatpush2.bf16.msra.mxu0 0
    %1397 = vmatprep.subr.bf16.mxu0 0
    %1398 = vmatpush2.bf16.msra.mxu0 0
    %1399 = vmatprep.subr.bf16.mxu0 0
    %1400 = vmatpush2.bf16.msra.mxu0 0
    %1401 = vmatprep.subr.bf16.mxu0 0
    %1402 = vmatpush2.bf16.msra.mxu0 0
    %1403 = vmatprep.subr.bf16.mxu0 0
    %1404 = vmatpush2.bf16.msra.mxu0 0
    %1405 = vmatprep.subr.bf16.mxu0 0
    %1406 = vmatpush2.bf16.msra.mxu0 0
    %1407 = vmatprep.subr.bf16.mxu0 0
    %1408 = vmatpush2.bf16.msra.mxu0 0
    %1409 = vmatprep.subr.bf16.mxu0 0
    %1410 = vmatpush2.bf16.msra.mxu0 0
    %1411 = vmatprep.mubr.bf16.mxu0 0
    %1412 = vmatmul.mubr.bf16.gmra.mxu0 %v1337
    %v1413 = vpop.f32.mrf.mxu0
    %v1414 = vadd.f32 0.0, %v1413
    %v1415 = vpop.f32.mrf.mxu0
    %v1416 = vadd.f32 0.0, %v1415
    %v1417 = vpop.f32.mrf.mxu0
    %v1418 = vpop.f32.mrf.mxu0
    %1419 = vdwg.mxu0
    %v1420 = vadd.f32 %v1333, %v1373
    %v1421 = vadd.f32 %v1334, %v1375
    %v1422 = vadd.f32 %v1335, %v1414
    %v1423 = vadd.f32 %v1336, %v1416
    %v1424 = vxor.u32 %v1420, 2147483648
    %v1425 = vmul.f32 %v1424, 1.442695
    %v1426 = vpow.pop %v1425
    %v1427 = vadd.f32 %v1426, 1.0
    %v1428 = vrcp.pop %v1427
    %v1429 = vmul.f32 1.0, %v1428
    %v1430 = vxor.u32 %v1421, 2147483648
    %v1431 = vmul.f32 %v1430, 1.442695
    %v1432 = vpow.pop %v1431
    %v1433 = vadd.f32 %v1432, 1.0
    %v1434 = vrcp.pop %v1433
    %v1435 = vmul.f32 1.0, %v1434
    %v1436 = vtanh.pop %v1422
    %v1437 = vxor.u32 %v1423, 2147483648
    %v1438 = vmul.f32 %v1437, 1.442695
    %v1439 = vpow.pop %v1438
    %v1440 = vadd.f32 %v1439, 1.0
    %v1441 = vrcp.pop %v1440
    %v1442 = vmul.f32 1.0, %v1441
    %v1443 = vmul.f32 %v1435, %v1325
    %v1444 = vmul.f32 %v1429, %v1436
    %v1445 = vadd.f32 %v1443, %v1444
    %v1446 = vtanh.pop %v1445
    %v1447 = vmul.f32 %v1442, %v1446
    %s1448 = scalar_lea.vmem [#allocation3], 40
    %1449 = vst [vmem:[%s1448] sm:$0xff] %v1447
    %s1450 = smul.u32 6, 4
    %s1451 = smul.addr %s1450, 8
    %s1452 = scalar_lea.vmem [#allocation2], %s1451
    %v1453 = vld [vmem:[%s1452] sm:$0xff]
    %v1454 = vld [vmem:[%s1452 + $0x8] sm:$0xff]
    %v1455 = vld [vmem:[%s1452 + $0x10] sm:$0xff]
    %v1456 = vld [vmem:[%s1452 + $0x18] sm:$0xff]
    %v1457 = vpack.c.bf16 %v1447, %v1447
    %1458 = vmatprep.subr.bf16.mxu0 %v704
    %1459 = vmatpush1.bf16.msra.mxu0 %v703
    %1460 = vmatprep.subr.bf16.mxu0 %v700
    %1461 = vmatpush1.bf16.msra.mxu0 %v699
    %1462 = vmatprep.subr.bf16.mxu0 %v696
    %1463 = vmatpush1.bf16.msra.mxu0 %v695
    %1464 = vmatprep.subr.bf16.mxu0 %v692
    %1465 = vmatpush1.bf16.msra.mxu0 %v691
    %1466 = vmatprep.subr.bf16.mxu0 %v688
    %1467 = vmatpush1.bf16.msra.mxu0 %v687
    %1468 = vmatprep.subr.bf16.mxu0 %v684
    %1469 = vmatpush1.bf16.msra.mxu0 %v683
    %1470 = vmatprep.subr.bf16.mxu0 %v680
    %1471 = vmatpush1.bf16.msra.mxu0 %v679
    %1472 = vmatprep.subr.bf16.mxu0 %v676
    %1473 = vmatpush1.bf16.msra.mxu0 %v675
    %1474 = vmatprep.subr.bf16.mxu0 0
    %1475 = vmatpush2.bf16.msra.mxu0 0
    %1476 = vmatprep.subr.bf16.mxu0 0
    %1477 = vmatpush2.bf16.msra.mxu0 0
    %1478 = vmatprep.subr.bf16.mxu0 0
    %1479 = vmatpush2.bf16.msra.mxu0 0
    %1480 = vmatprep.subr.bf16.mxu0 0
    %1481 = vmatpush2.bf16.msra.mxu0 0
    %1482 = vmatprep.subr.bf16.mxu0 0
    %1483 = vmatpush2.bf16.msra.mxu0 0
    %1484 = vmatprep.subr.bf16.mxu0 0
    %1485 = vmatpush2.bf16.msra.mxu0 0
    %1486 = vmatprep.subr.bf16.mxu0 0
    %1487 = vmatpush2.bf16.msra.mxu0 0
    %1488 = vmatprep.subr.bf16.mxu0 0
    %1489 = vmatpush2.bf16.msra.mxu0 0
    %1490 = vmatprep.mubr.bf16.mxu0 0
    %1491 = vmatmul.mubr.bf16.gmra.mxu0 %v1457
    %v1492 = vpop.f32.mrf.mxu0
    %v1493 = vadd.f32 0.0, %v1492
    %v1494 = vpop.f32.mrf.mxu0
    %v1495 = vadd.f32 0.0, %v1494
    %v1496 = vpop.f32.mrf.mxu0
    %v1497 = vpop.f32.mrf.mxu0
    %1498 = vdwg.mxu0
    %1499 = vmatprep.subr.bf16.mxu0 %v706
    %1500 = vmatpush1.bf16.msra.mxu0 %v705
    %1501 = vmatprep.subr.bf16.mxu0 %v702
    %1502 = vmatpush1.bf16.msra.mxu0 %v701
    %1503 = vmatprep.subr.bf16.mxu0 %v698
    %1504 = vmatpush1.bf16.msra.mxu0 %v697
    %1505 = vmatprep.subr.bf16.mxu0 %v694
    %1506 = vmatpush1.bf16.msra.mxu0 %v693
    %1507 = vmatprep.subr.bf16.mxu0 %v690
    %1508 = vmatpush1.bf16.msra.mxu0 %v689
    %1509 = vmatprep.subr.bf16.mxu0 %v686
    %1510 = vmatpush1.bf16.msra.mxu0 %v685
    %1511 = vmatprep.subr.bf16.mxu0 %v682
    %1512 = vmatpush1.bf16.msra.mxu0 %v681
    %1513 = vmatprep.subr.bf16.mxu0 %v678
    %1514 = vmatpush1.bf16.msra.mxu0 %v677
    %1515 = vmatprep.subr.bf16.mxu0 0
    %1516 = vmatpush2.bf16.msra.mxu0 0
    %1517 = vmatprep.subr.bf16.mxu0 0
    %1518 = vmatpush2.bf16.msra.mxu0 0
    %1519 = vmatprep.subr.bf16.mxu0 0
    %1520 = vmatpush2.bf16.msra.mxu0 0
    %1521 = vmatprep.subr.bf16.mxu0 0
    %1522 = vmatpush2.bf16.msra.mxu0 0
    %1523 = vmatprep.subr.bf16.mxu0 0
    %1524 = vmatpush2.bf16.msra.mxu0 0
    %1525 = vmatprep.subr.bf16.mxu0 0
    %1526 = vmatpush2.bf16.msra.mxu0 0
    %1527 = vmatprep.subr.bf16.mxu0 0
    %1528 = vmatpush2.bf16.msra.mxu0 0
    %1529 = vmatprep.subr.bf16.mxu0 0
    %1530 = vmatpush2.bf16.msra.mxu0 0
    %1531 = vmatprep.mubr.bf16.mxu0 0
    %1532 = vmatmul.mubr.bf16.gmra.mxu0 %v1457
    %v1533 = vpop.f32.mrf.mxu0
    %v1534 = vadd.f32 0.0, %v1533
    %v1535 = vpop.f32.mrf.mxu0
    %v1536 = vadd.f32 0.0, %v1535
    %v1537 = vpop.f32.mrf.mxu0
    %v1538 = vpop.f32.mrf.mxu0
    %1539 = vdwg.mxu0
    %v1540 = vadd.f32 %v1453, %v1493
    %v1541 = vadd.f32 %v1454, %v1495
    %v1542 = vadd.f32 %v1455, %v1534
    %v1543 = vadd.f32 %v1456, %v1536
    %v1544 = vxor.u32 %v1540, 2147483648
    %v1545 = vmul.f32 %v1544, 1.442695
    %v1546 = vpow.pop %v1545
    %v1547 = vadd.f32 %v1546, 1.0
    %v1548 = vrcp.pop %v1547
    %v1549 = vmul.f32 1.0, %v1548
    %v1550 = vxor.u32 %v1541, 2147483648
    %v1551 = vmul.f32 %v1550, 1.442695
    %v1552 = vpow.pop %v1551
    %v1553 = vadd.f32 %v1552, 1.0
    %v1554 = vrcp.pop %v1553
    %v1555 = vmul.f32 1.0, %v1554
    %v1556 = vtanh.pop %v1542
    %v1557 = vxor.u32 %v1543, 2147483648
    %v1558 = vmul.f32 %v1557, 1.442695
    %v1559 = vpow.pop %v1558
    %v1560 = vadd.f32 %v1559, 1.0
    %v1561 = vrcp.pop %v1560
    %v1562 = vmul.f32 1.0, %v1561
    %v1563 = vmul.f32 %v1555, %v1445
    %v1564 = vmul.f32 %v1549, %v1556
    %v1565 = vadd.f32 %v1563, %v1564
    %v1566 = vtanh.pop %v1565
    %v1567 = vmul.f32 %v1562, %v1566
    %s1568 = scalar_lea.vmem [#allocation3], 48
    %1569 = vst [vmem:[%s1568] sm:$0xff] %v1567
    %s1570 = smul.u32 7, 4
    %s1571 = smul.addr %s1570, 8
    %s1572 = scalar_lea.vmem [#allocation2], %s1571
    %v1573 = vld [vmem:[%s1572] sm:$0xff]
    %v1574 = vld [vmem:[%s1572 + $0x8] sm:$0xff]
    %v1575 = vld [vmem:[%s1572 + $0x10] sm:$0xff]
    %v1576 = vld [vmem:[%s1572 + $0x18] sm:$0xff]
    %v1577 = vpack.c.bf16 %v1567, %v1567
    %1578 = vmatprep.subr.bf16.mxu0 %v704
    %1579 = vmatpush1.bf16.msra.mxu0 %v703
    %1580 = vmatprep.subr.bf16.mxu0 %v700
    %1581 = vmatpush1.bf16.msra.mxu0 %v699
    %1582 = vmatprep.subr.bf16.mxu0 %v696
    %1583 = vmatpush1.bf16.msra.mxu0 %v695
    %1584 = vmatprep.subr.bf16.mxu0 %v692
    %1585 = vmatpush1.bf16.msra.mxu0 %v691
    %1586 = vmatprep.subr.bf16.mxu0 %v688
    %1587 = vmatpush1.bf16.msra.mxu0 %v687
    %1588 = vmatprep.subr.bf16.mxu0 %v684
    %1589 = vmatpush1.bf16.msra.mxu0 %v683
    %1590 = vmatprep.subr.bf16.mxu0 %v680
    %1591 = vmatpush1.bf16.msra.mxu0 %v679
    %1592 = vmatprep.subr.bf16.mxu0 %v676
    %1593 = vmatpush1.bf16.msra.mxu0 %v675
    %1594 = vmatprep.subr.bf16.mxu0 0
    %1595 = vmatpush2.bf16.msra.mxu0 0
    %1596 = vmatprep.subr.bf16.mxu0 0
    %1597 = vmatpush2.bf16.msra.mxu0 0
    %1598 = vmatprep.subr.bf16.mxu0 0
    %1599 = vmatpush2.bf16.msra.mxu0 0
    %1600 = vmatprep.subr.bf16.mxu0 0
    %1601 = vmatpush2.bf16.msra.mxu0 0
    %1602 = vmatprep.subr.bf16.mxu0 0
    %1603 = vmatpush2.bf16.msra.mxu0 0
    %1604 = vmatprep.subr.bf16.mxu0 0
    %1605 = vmatpush2.bf16.msra.mxu0 0
    %1606 = vmatprep.subr.bf16.mxu0 0
    %1607 = vmatpush2.bf16.msra.mxu0 0
    %1608 = vmatprep.subr.bf16.mxu0 0
    %1609 = vmatpush2.bf16.msra.mxu0 0
    %1610 = vmatprep.mubr.bf16.mxu0 0
    %1611 = vmatmul.mubr.bf16.gmra.mxu0 %v1577
    %v1612 = vpop.f32.mrf.mxu0
    %v1613 = vadd.f32 0.0, %v1612
    %v1614 = vpop.f32.mrf.mxu0
    %v1615 = vadd.f32 0.0, %v1614
    %v1616 = vpop.f32.mrf.mxu0
    %v1617 = vpop.f32.mrf.mxu0
    %1618 = vdwg.mxu0
    %1619 = vmatprep.subr.bf16.mxu0 %v706
    %1620 = vmatpush1.bf16.msra.mxu0 %v705
    %1621 = vmatprep.subr.bf16.mxu0 %v702
    %1622 = vmatpush1.bf16.msra.mxu0 %v701
    %1623 = vmatprep.subr.bf16.mxu0 %v698
    %1624 = vmatpush1.bf16.msra.mxu0 %v697
    %1625 = vmatprep.subr.bf16.mxu0 %v694
    %1626 = vmatpush1.bf16.msra.mxu0 %v693
    %1627 = vmatprep.subr.bf16.mxu0 %v690
    %1628 = vmatpush1.bf16.msra.mxu0 %v689
    %1629 = vmatprep.subr.bf16.mxu0 %v686
    %1630 = vmatpush1.bf16.msra.mxu0 %v685
    %1631 = vmatprep.subr.bf16.mxu0 %v682
    %1632 = vmatpush1.bf16.msra.mxu0 %v681
    %1633 = vmatprep.subr.bf16.mxu0 %v678
    %1634 = vmatpush1.bf16.msra.mxu0 %v677
    %1635 = vmatprep.subr.bf16.mxu0 0
    %1636 = vmatpush2.bf16.msra.mxu0 0
    %1637 = vmatprep.subr.bf16.mxu0 0
    %1638 = vmatpush2.bf16.msra.mxu0 0
    %1639 = vmatprep.subr.bf16.mxu0 0
    %1640 = vmatpush2.bf16.msra.mxu0 0
    %1641 = vmatprep.subr.bf16.mxu0 0
    %1642 = vmatpush2.bf16.msra.mxu0 0
    %1643 = vmatprep.subr.bf16.mxu0 0
    %1644 = vmatpush2.bf16.msra.mxu0 0
    %1645 = vmatprep.subr.bf16.mxu0 0
    %1646 = vmatpush2.bf16.msra.mxu0 0
    %1647 = vmatprep.subr.bf16.mxu0 0
    %1648 = vmatpush2.bf16.msra.mxu0 0
    %1649 = vmatprep.subr.bf16.mxu0 0
    %1650 = vmatpush2.bf16.msra.mxu0 0
    %1651 = vmatprep.mubr.bf16.mxu0 0
    %1652 = vmatmul.mubr.bf16.gmra.mxu0 %v1577
    %v1653 = vpop.f32.mrf.mxu0
    %v1654 = vadd.f32 0.0, %v1653
    %v1655 = vpop.f32.mrf.mxu0
    %v1656 = vadd.f32 0.0, %v1655
    %v1657 = vpop.f32.mrf.mxu0
    %v1658 = vpop.f32.mrf.mxu0
    %1659 = vdwg.mxu0
    %v1660 = vadd.f32 %v1573, %v1613
    %v1661 = vadd.f32 %v1574, %v1615
    %v1662 = vadd.f32 %v1575, %v1654
    %v1663 = vadd.f32 %v1576, %v1656
    %v1664 = vxor.u32 %v1660, 2147483648
    %v1665 = vmul.f32 %v1664, 1.442695
    %v1666 = vpow.pop %v1665
    %v1667 = vadd.f32 %v1666, 1.0
    %v1668 = vrcp.pop %v1667
    %v1669 = vmul.f32 1.0, %v1668
    %v1670 = vxor.u32 %v1661, 2147483648
    %v1671 = vmul.f32 %v1670, 1.442695
    %v1672 = vpow.pop %v1671
    %v1673 = vadd.f32 %v1672, 1.0
    %v1674 = vrcp.pop %v1673
    %v1675 = vmul.f32 1.0, %v1674
    %v1676 = vtanh.pop %v1662
    %v1677 = vxor.u32 %v1663, 2147483648
    %v1678 = vmul.f32 %v1677, 1.442695
    %v1679 = vpow.pop %v1678
    %v1680 = vadd.f32 %v1679, 1.0
    %v1681 = vrcp.pop %v1680
    %v1682 = vmul.f32 1.0, %v1681
    %v1683 = vmul.f32 %v1675, %v1565
    %v1684 = vmul.f32 %v1669, %v1676
    %v1685 = vadd.f32 %v1683, %v1684
    %v1686 = vtanh.pop %v1685
    %v1687 = vmul.f32 %v1682, %v1686
    %s1688 = scalar_lea.vmem [#allocation3], 56
    %1689 = vst [vmem:[%s1688] sm:$0xff] %v1687
    %1690 = vst [vmem:[#allocation16] sm:$0xff] %v1687
    %1691 = vst [vmem:[#allocation18] sm:$0xff] %v1685
    %v1692 = vld [vmem:[#allocation3] sm:$0xff]
    %v1693 = vld [vmem:[#allocation3 + $0x8] sm:$0xff]
    %v1694 = vld [vmem:[#allocation3 + $0x10] sm:$0xff]
    %v1695 = vld [vmem:[#allocation3 + $0x18] sm:$0xff]
    %v1696 = vld [vmem:[#allocation3 + $0x20] sm:$0xff]
    %v1697 = vld [vmem:[#allocation3 + $0x28] sm:$0xff]
    %v1698 = vld [vmem:[#allocation3 + $0x30] sm:$0xff]
    %v1699 = vld [vmem:[#allocation3 + $0x38] sm:$0xff]
    %v1700 = vcombine.low %v1692, %v1694
    %v1701 = vcombine.high %v1692, %v1694
    %v1703 = vunpack.c.l.s4 1983009808
    %v1704 = vunpack.c.0.s8 %v1703
    %v1705 = vlaneseq
    %v1706 = vshrl.u32 %v1705, 7
    %v1707 = vsub.s32 %v1704, %v1706
    %v1708 = vrot.slane %v1700, %v1707
    %v1710 = vunpack.c.l.s4 1983009808
    %v1711 = vunpack.c.0.s8 %v1710
    %v1712 = vlaneseq
    %v1713 = vshrl.u32 %v1712, 7
    %v1714 = vsub.s32 %v1711, %v1713
    %v1715 = vrot.slane %v1701, %v1714
    %v1716 = vcombine.low %v1693, %v1695
    %v1717 = vcombine.high %v1693, %v1695
    %v1719 = vunpack.c.l.s4 1983009808
    %v1720 = vunpack.c.0.s8 %v1719
    %v1721 = vlaneseq
    %v1722 = vshrl.u32 %v1721, 7
    %v1723 = vsub.s32 %v1720, %v1722
    %v1724 = vrot.slane %v1716, %v1723
    %v1726 = vunpack.c.l.s4 1983009808
    %v1727 = vunpack.c.0.s8 %v1726
    %v1728 = vlaneseq
    %v1729 = vshrl.u32 %v1728, 7
    %v1730 = vsub.s32 %v1727, %v1729
    %v1731 = vrot.slane %v1717, %v1730
    %v1732 = vcombine.low %v1696, %v1698
    %v1733 = vcombine.high %v1696, %v1698
    %v1735 = vunpack.c.l.s4 1983009808
    %v1736 = vunpack.c.0.s8 %v1735
    %v1737 = vlaneseq
    %v1738 = vshrl.u32 %v1737, 7
    %v1739 = vsub.s32 %v1736, %v1738
    %v1740 = vrot.slane %v1732, %v1739
    %v1742 = vunpack.c.l.s4 1983009808
    %v1743 = vunpack.c.0.s8 %v1742
    %v1744 = vlaneseq
    %v1745 = vshrl.u32 %v1744, 7
    %v1746 = vsub.s32 %v1743, %v1745
    %v1747 = vrot.slane %v1733, %v1746
    %v1748 = vcombine.low %v1697, %v1699
    %v1749 = vcombine.high %v1697, %v1699
    %v1751 = vunpack.c.l.s4 1983009808
    %v1752 = vunpack.c.0.s8 %v1751
    %v1753 = vlaneseq
    %v1754 = vshrl.u32 %v1753, 7
    %v1755 = vsub.s32 %v1752, %v1754
    %v1756 = vrot.slane %v1748, %v1755
    %v1758 = vunpack.c.l.s4 1983009808
    %v1759 = vunpack.c.0.s8 %v1758
    %v1760 = vlaneseq
    %v1761 = vshrl.u32 %v1760, 7
    %v1762 = vsub.s32 %v1759, %v1761
    %v1763 = vrot.slane %v1749, %v1762
    %v1764 = vcombine.low %v1708, %v1724
    %v1765 = vcombine.high %v1708, %v1724
    %v1767 = vunpack.c.l.s4 1934713408
    %v1768 = vunpack.c.0.s8 %v1767
    %v1769 = vlaneseq
    %v1770 = vshrl.u32 %v1769, 7
    %v1771 = vsub.s32 %v1768, %v1770
    %v1772 = vrot.slane %v1764, %v1771
    %v1774 = vunpack.c.l.s4 1934713408
    %v1775 = vunpack.c.0.s8 %v1774
    %v1776 = vlaneseq
    %v1777 = vshrl.u32 %v1776, 7
    %v1778 = vsub.s32 %v1775, %v1777
    %v1779 = vrot.slane %v1765, %v1778
    %v1780 = vcombine.low %v1715, %v1731
    %v1781 = vcombine.high %v1715, %v1731
    %v1783 = vunpack.c.l.s4 1934713408
    %v1784 = vunpack.c.0.s8 %v1783
    %v1785 = vlaneseq
    %v1786 = vshrl.u32 %v1785, 7
    %v1787 = vsub.s32 %v1784, %v1786
    %v1788 = vrot.slane %v1780, %v1787
    %v1790 = vunpack.c.l.s4 1934713408
    %v1791 = vunpack.c.0.s8 %v1790
    %v1792 = vlaneseq
    %v1793 = vshrl.u32 %v1792, 7
    %v1794 = vsub.s32 %v1791, %v1793
    %v1795 = vrot.slane %v1781, %v1794
    %v1796 = vcombine.low %v1740, %v1756
    %v1797 = vcombine.high %v1740, %v1756
    %v1799 = vunpack.c.l.s4 1934713408
    %v1800 = vunpack.c.0.s8 %v1799
    %v1801 = vlaneseq
    %v1802 = vshrl.u32 %v1801, 7
    %v1803 = vsub.s32 %v1800, %v1802
    %v1804 = vrot.slane %v1796, %v1803
    %v1806 = vunpack.c.l.s4 1934713408
    %v1807 = vunpack.c.0.s8 %v1806
    %v1808 = vlaneseq
    %v1809 = vshrl.u32 %v1808, 7
    %v1810 = vsub.s32 %v1807, %v1809
    %v1811 = vrot.slane %v1797, %v1810
    %v1812 = vcombine.low %v1747, %v1763
    %v1813 = vcombine.high %v1747, %v1763
    %v1815 = vunpack.c.l.s4 1934713408
    %v1816 = vunpack.c.0.s8 %v1815
    %v1817 = vlaneseq
    %v1818 = vshrl.u32 %v1817, 7
    %v1819 = vsub.s32 %v1816, %v1818
    %v1820 = vrot.slane %v1812, %v1819
    %v1822 = vunpack.c.l.s4 1934713408
    %v1823 = vunpack.c.0.s8 %v1822
    %v1824 = vlaneseq
    %v1825 = vshrl.u32 %v1824, 7
    %v1826 = vsub.s32 %v1823, %v1825
    %v1827 = vrot.slane %v1813, %v1826
    %v1828 = vcombine.low %v1772, %v1804
    %v1829 = vcombine.high %v1772, %v1804
    %v1830 = vcombine.low %v1779, %v1811
    %v1831 = vcombine.high %v1779, %v1811
    %v1832 = vcombine.low %v1788, %v1820
    %v1833 = vcombine.high %v1788, %v1820
    %v1834 = vcombine.low %v1795, %v1827
    %v1835 = vcombine.high %v1795, %v1827
    %v1836 = vpack.c.bf16 %v1829, %v1828
    %v1837 = vpack.c.bf16 %v1831, %v1830
    %v1838 = vpack.c.bf16 %v1833, %v1832
    %v1839 = vpack.c.bf16 %v1835, %v1834
    %v1840 = vld [vmem:[#allocation13] sm:$0xff]
    %v1841 = vld [vmem:[#allocation13 + $0x8] sm:$0xff]
    %v1842 = vld [vmem:[#allocation13 + $0x10] sm:$0xff]
    %v1843 = vld [vmem:[#allocation13 + $0x18] sm:$0xff]
    %v1844 = vld [vmem:[#allocation13 + $0x20] sm:$0xff]
    %v1845 = vld [vmem:[#allocation13 + $0x28] sm:$0xff]
    %v1846 = vld [vmem:[#allocation13 + $0x30] sm:$0xff]
    %v1847 = vld [vmem:[#allocation13 + $0x38] sm:$0xff]
    %v1848 = vld [vmem:[#allocation13 + $0x40] sm:$0xff]
    %v1849 = vld [vmem:[#allocation13 + $0x48] sm:$0xff]
    %v1850 = vld [vmem:[#allocation13 + $0x50] sm:$0xff]
    %v1851 = vld [vmem:[#allocation13 + $0x58] sm:$0xff]
    %v1852 = vld [vmem:[#allocation13 + $0x60] sm:$0xff]
    %v1853 = vld [vmem:[#allocation13 + $0x68] sm:$0xff]
    %v1854 = vld [vmem:[#allocation13 + $0x70] sm:$0xff]
    %v1855 = vld [vmem:[#allocation13 + $0x78] sm:$0xff]
    %v1856 = vld [vmem:[%s7] sm:$0x3]
    %v1858 = vlaneseq
    %v1859 = vshrl.u32 %v1858, 7
    %v1860 = vsub.s32 0, %v1859
    %v1861 = vrot.slane %v1856, %v1860
    %v1862 = vlaneseq
    %v1863 = vshrl.u32 %v1862, 7
    %v1864 = vsub.s32 1, %v1863
    %v1865 = vrot.slane %v1856, %v1864
    %v1884 = vunpack.c.l.b16 %v1840
    %v1885 = vunpack.c.h.b16 %v1840
    %v1886 = vunpack.c.l.b16 %v1841
    %v1887 = vunpack.c.h.b16 %v1841
    %v1888 = vunpack.c.l.b16 %v1842
    %v1889 = vunpack.c.h.b16 %v1842
    %v1890 = vunpack.c.l.b16 %v1843
    %v1891 = vunpack.c.h.b16 %v1843
    %v1892 = vunpack.c.l.b16 %v1844
    %v1893 = vunpack.c.h.b16 %v1844
    %v1894 = vunpack.c.l.b16 %v1845
    %v1895 = vunpack.c.h.b16 %v1845
    %v1896 = vunpack.c.l.b16 %v1846
    %v1897 = vunpack.c.h.b16 %v1846
    %v1898 = vunpack.c.l.b16 %v1847
    %v1899 = vunpack.c.h.b16 %v1847
    %v1900 = vunpack.c.l.b16 %v1848
    %v1901 = vunpack.c.h.b16 %v1848
    %v1902 = vunpack.c.l.b16 %v1849
    %v1903 = vunpack.c.h.b16 %v1849
    %v1904 = vunpack.c.l.b16 %v1850
    %v1905 = vunpack.c.h.b16 %v1850
    %v1906 = vunpack.c.l.b16 %v1851
    %v1907 = vunpack.c.h.b16 %v1851
    %v1908 = vunpack.c.l.b16 %v1852
    %v1909 = vunpack.c.h.b16 %v1852
    %v1910 = vunpack.c.l.b16 %v1853
    %v1911 = vunpack.c.h.b16 %v1853
    %v1912 = vunpack.c.l.b16 %v1854
    %v1913 = vunpack.c.h.b16 %v1854
    %v1914 = vunpack.c.l.b16 %v1855
    %v1915 = vunpack.c.h.b16 %v1855
    %v1916 = vpack.c.b16 %v1886, %v1884
    %v1917 = vpack.c.b16 %v1887, %v1885
    %v1918 = vpack.c.b16 %v1890, %v1888
    %v1919 = vpack.c.b16 %v1891, %v1889
    %v1920 = vpack.c.b16 %v1894, %v1892
    %v1921 = vpack.c.b16 %v1895, %v1893
    %v1922 = vpack.c.b16 %v1898, %v1896
    %v1923 = vpack.c.b16 %v1899, %v1897
    %v1924 = vpack.c.b16 %v1902, %v1900
    %v1925 = vpack.c.b16 %v1903, %v1901
    %v1926 = vpack.c.b16 %v1906, %v1904
    %v1927 = vpack.c.b16 %v1907, %v1905
    %v1928 = vpack.c.b16 %v1910, %v1908
    %v1929 = vpack.c.b16 %v1911, %v1909
    %v1930 = vpack.c.b16 %v1914, %v1912
    %v1931 = vpack.c.b16 %v1915, %v1913
    %1948 = vmatprep.subr.bf16.mxu0 %v1931
    %1949 = vmatpush1.bf16.msra.mxu0 %v1930
    %1950 = vmatprep.subr.bf16.mxu0 %v1929
    %1951 = vmatpush1.bf16.msra.mxu0 %v1928
    %1952 = vmatprep.subr.bf16.mxu0 %v1927
    %1953 = vmatpush1.bf16.msra.mxu0 %v1926
    %1954 = vmatprep.subr.bf16.mxu0 %v1925
    %1955 = vmatpush1.bf16.msra.mxu0 %v1924
    %1956 = vmatprep.subr.bf16.mxu0 %v1923
    %1957 = vmatpush1.bf16.msra.mxu0 %v1922
    %1958 = vmatprep.subr.bf16.mxu0 %v1921
    %1959 = vmatpush1.bf16.msra.mxu0 %v1920
    %1960 = vmatprep.subr.bf16.mxu0 %v1919
    %1961 = vmatpush1.bf16.msra.mxu0 %v1918
    %1962 = vmatprep.subr.bf16.mxu0 %v1917
    %1963 = vmatpush1.bf16.msra.mxu0 %v1916
    %1964 = vmatprep.subr.bf16.mxu0 0
    %1965 = vmatpush2.bf16.msra.mxu0 0
    %1966 = vmatprep.subr.bf16.mxu0 0
    %1967 = vmatpush2.bf16.msra.mxu0 0
    %1968 = vmatprep.subr.bf16.mxu0 0
    %1969 = vmatpush2.bf16.msra.mxu0 0
    %1970 = vmatprep.subr.bf16.mxu0 0
    %1971 = vmatpush2.bf16.msra.mxu0 0
    %1972 = vmatprep.subr.bf16.mxu0 0
    %1973 = vmatpush2.bf16.msra.mxu0 0
    %1974 = vmatprep.subr.bf16.mxu0 0
    %1975 = vmatpush2.bf16.msra.mxu0 0
    %1976 = vmatprep.subr.bf16.mxu0 0
    %1977 = vmatpush2.bf16.msra.mxu0 0
    %1978 = vmatprep.subr.bf16.mxu0 0
    %1979 = vmatpush2.bf16.msra.mxu0 0
    %1980 = vmatprep.mubr.bf16.mxu0 0
    %1981 = vmatmul.mubr.bf16.gmra.mxu0 %v1836
    %v1982 = vpop.f32.mrf.mxu0
    %v1983 = vadd.f32 %v1861, %v1982
    %v1984 = vpop.f32.mrf.mxu0
    %v1985 = vadd.f32 %v1865, %v1984
    %v1986 = vpop.f32.mrf.mxu0
    %v1987 = vadd.f32 %v1861, %v1986
    %v1988 = vpop.f32.mrf.mxu0
    %v1989 = vadd.f32 %v1865, %v1988
    %1990 = vmatprep.mubr.bf16.mxu0 0
    %1991 = vmatmul.mubr.bf16.gmra.mxu0 %v1837
    %v1992 = vpop.f32.mrf.mxu0
    %v1993 = vadd.f32 %v1861, %v1992
    %v1994 = vpop.f32.mrf.mxu0
    %v1995 = vadd.f32 %v1865, %v1994
    %v1996 = vpop.f32.mrf.mxu0
    %v1997 = vadd.f32 %v1861, %v1996
    %v1998 = vpop.f32.mrf.mxu0
    %v1999 = vadd.f32 %v1865, %v1998
    %2000 = vmatprep.mubr.bf16.mxu0 0
    %2001 = vmatmul.mubr.bf16.gmra.mxu0 %v1838
    %v2002 = vpop.f32.mrf.mxu0
    %v2003 = vadd.f32 %v1861, %v2002
    %v2004 = vpop.f32.mrf.mxu0
    %v2005 = vadd.f32 %v1865, %v2004
    %v2006 = vpop.f32.mrf.mxu0
    %v2007 = vadd.f32 %v1861, %v2006
    %v2008 = vpop.f32.mrf.mxu0
    %v2009 = vadd.f32 %v1865, %v2008
    %2010 = vmatprep.mubr.bf16.mxu0 0
    %2011 = vmatmul.mubr.bf16.gmra.mxu0 %v1839
    %v2012 = vpop.f32.mrf.mxu0
    %v2013 = vadd.f32 %v1861, %v2012
    %v2014 = vpop.f32.mrf.mxu0
    %v2015 = vadd.f32 %v1865, %v2014
    %v2016 = vpop.f32.mrf.mxu0
    %v2017 = vadd.f32 %v1861, %v2016
    %v2018 = vpop.f32.mrf.mxu0
    %v2019 = vadd.f32 %v1865, %v2018
    %2020 = vdwg.mxu0
    %2021 = vst [vmem:[#allocation15] sm:$0xff] %v1983
    %2022 = vst [vmem:[#allocation15 + $0x8] sm:$0xff] %v1985
    %2023 = vst [vmem:[#allocation15 + $0x10] sm:$0xff] %v1987
    %2024 = vst [vmem:[#allocation15 + $0x18] sm:$0xff] %v1989
    %2025 = vst [vmem:[#allocation15 + $0x20] sm:$0xff] %v1993
    %2026 = vst [vmem:[#allocation15 + $0x28] sm:$0xff] %v1995
    %2027 = vst [vmem:[#allocation15 + $0x30] sm:$0xff] %v1997
    %2028 = vst [vmem:[#allocation15 + $0x38] sm:$0xff] %v1999
    %2029 = vst [vmem:[#allocation15 + $0x40] sm:$0xff] %v2003
    %2030 = vst [vmem:[#allocation15 + $0x48] sm:$0xff] %v2005
    %2031 = vst [vmem:[#allocation15 + $0x50] sm:$0xff] %v2007
    %2032 = vst [vmem:[#allocation15 + $0x58] sm:$0xff] %v2009
    %2033 = vst [vmem:[#allocation15 + $0x60] sm:$0xff] %v2013
    %2034 = vst [vmem:[#allocation15 + $0x68] sm:$0xff] %v2015
    %2035 = vst [vmem:[#allocation15 + $0x70] sm:$0xff] %v2017
    %2036 = vst [vmem:[#allocation15 + $0x78] sm:$0xff] %v2019
    // Predicated region
    $region58: #{tpu_custom_call.1} parent=1 // pred_check
      _
    $region59: #{tpu_custom_call.1} parent=1 // pred_check_branch
      %2038 = sbr.rel (0) target = $region61
    $region60: #{tpu_custom_call.1} parent=1 // pred_region
      %s2040 = ssub.s32 2048, 2048
      %2041 = vsyncadd [#allocation6], %s2040
      %s2042 = sshll.u32 [#allocation15], 4
      %s2043 = int_to_ptr.vmem [resolvable:$true] %s2042
      %2048 = dma.vmem_to_hbm [thread:$0]  %s2043, 2048, %s8, [#allocation6], 256, 256, 16
    $region61: #{tpu_custom_call.1} parent=1 // pred_fallthru
      _
    // Predicated region
    $region62: #{tpu_custom_call.1} parent=1 // pred_check
      _
    $region63: #{tpu_custom_call.1} parent=1 // pred_check_branch
      %2050 = sbr.rel (0) target = $region65
    $region64: #{tpu_custom_call.1} parent=1 // pred_region
      %s2052 = ssub.s32 128, 128
      %2053 = vsyncadd [#allocation17], %s2052
      %s2055 = sshll.u32 [#allocation16], 4
      %s2056 = int_to_ptr.vmem [resolvable:$true] %s2055
      %2058 = dma.vmem_to_hbm [thread:$0]  %s2056, 128, %s9, [#allocation17]
    $region65: #{tpu_custom_call.1} parent=1 // pred_fallthru
      _
    // Predicated region
    $region66: #{tpu_custom_call.1} parent=1 // pred_check
      _
    $region67: #{tpu_custom_call.1} parent=1 // pred_check_branch
      %2060 = sbr.rel (0) target = $region69
    $region68: #{tpu_custom_call.1} parent=1 // pred_region
      %s2062 = ssub.s32 128, 128
      %2063 = vsyncadd [#allocation17], %s2062
      %s2065 = sshll.u32 [#allocation18], 4
      %s2066 = int_to_ptr.vmem [resolvable:$true] %s2065
      %2068 = dma.vmem_to_hbm [thread:$0]  %s2066, 128, %s10, [#allocation17]
    $region69: #{tpu_custom_call.1} parent=1 // pred_fallthru
      _
    // Predicated region
    $region70: #{tpu_custom_call.1} parent=1 // pred_check
      _
    $region71: #{tpu_custom_call.1} parent=1 // pred_check_branch
      %2070 = sbr.rel (0) target = $region73
    $region72: #{tpu_custom_call.1} parent=1 // pred_region
      %2071 = dma.done [#allocation6], 2048
    $region73: #{tpu_custom_call.1} parent=1 // pred_fallthru
      _
    // Predicated region
    $region74: #{tpu_custom_call.1} parent=1 // pred_check
      _
    $region75: #{tpu_custom_call.1} parent=1 // pred_check_branch
      %2073 = sbr.rel (0) target = $region77
    $region76: #{tpu_custom_call.1} parent=1 // pred_region
      %2074 = dma.done [#allocation17], 128
    $region77: #{tpu_custom_call.1} parent=1 // pred_fallthru
      _
    // Predicated region
    $region78: #{tpu_custom_call.1} parent=1 // pred_check
      _
    $region79: #{tpu_custom_call.1} parent=1 // pred_check_branch
      %2076 = sbr.rel (0) target = $region81
    $region80: #{tpu_custom_call.1} parent=1 // pred_region
      %2077 = dma.done [#allocation17], 128
    $region81: #{tpu_custom_call.1} parent=1 // pred_fallthru
      _
    %2078 = vsyncpa [#allocation5], 1
    %2079 = vsyncpa [#allocation8], 1
    %2080 = vsyncpa [#allocation11], 1
    %2081 = vsyncpa [#allocation14], 1
    %2082 = vsyncpa [#allocation6], 1
    %2083 = vsyncpa [#allocation17], 1

</llo_original>
